<compile_context>
chip_gen: v5e
topology: v5e:2x2
jax: 0.10.0
libtpu: 0.0.40
codegen_flags: <defaults>
</compile_context>

<pallas_src>
import jax
import jax.numpy as jnp
from jax.experimental import pallas as pl
from jax.experimental.pallas import tpu as pltpu


# -----------------------------------------------------------------------------
# Kernel bodies
# -----------------------------------------------------------------------------
def _gate_core(x, phi_f32, wtx, bcomb, wpsi, bpsi, wout, bout, out_dtype):
    # theta_x: (Ci, Cx) @ (Cx, tp) on the MXU, f32 accumulation.
    theta = jnp.dot(wtx, x, preferred_element_type=jnp.float32)
    # Folded bias (b_theta + b_phi) + ReLU in one expression (single live
    # (Ci, tp) f32 intermediate -> lower VMEM / store pressure).
    combined = jnp.maximum(theta + phi_f32 + bcomb, 0.0)
    # psi: single-output-channel conv as VPU mul + sublane (XLU) reduction.
    psi = jax.nn.sigmoid(jnp.sum(combined * wpsi, axis=0, keepdims=True) + bpsi)
    gated = x * psi.astype(x.dtype)
    out = jnp.dot(wout, gated, preferred_element_type=jnp.float32) + bout
    return out.astype(out_dtype)


def _kernel_fused_phi(x_ref, g_ref, wtx_ref, wpg_ref, bcomb_ref,
                      wpsi_ref, bpsi_ref, wout_ref, bout_ref, o_ref):
    """g is already at x's resolution; phi = W_phi @ g computed in-kernel."""
    x = x_ref[0]                                                      # (Cx, tp)
    phi = jnp.dot(wpg_ref[...], g_ref[0], preferred_element_type=jnp.float32)
    o_ref[0] = _gate_core(x, phi, wtx_ref[...], bcomb_ref[...], wpsi_ref[...],
                          bpsi_ref[...], wout_ref[...], bout_ref[...], o_ref.dtype)


def _kernel_pre_phi(x_ref, phi_ref, wtx_ref, bcomb_ref,
                    wpsi_ref, bpsi_ref, wout_ref, bout_ref, o_ref):
    """phi (without bias) was precomputed at low resolution and upsampled."""
    x = x_ref[0]                                                      # (Cx, tp)
    phi = phi_ref[0].astype(jnp.float32)                              # (Ci, tp)
    o_ref[0] = _gate_core(x, phi, wtx_ref[...], bcomb_ref[...], wpsi_ref[...],
                          bpsi_ref[...], wout_ref[...], bout_ref[...], o_ref.dtype)


# -----------------------------------------------------------------------------
# Hardware-aware VMEM plan and tile-size selection
# -----------------------------------------------------------------------------
def _vmem_plan():
    """Return (tile VMEM budget, Mosaic vmem_limit_bytes, has-2-TensorCores)."""
    cap = 64 * 1024 * 1024              # conservative default = v7x per-core VMEM
    try:
        cap = int(pltpu.get_tpu_info().vmem_capacity_bytes)
    except Exception:
        pass
    # v7x: 64 MiB VMEM per core, 2 TensorCores / chip.  v5e / v6e: 128 MiB, 1 TC.
    two_cores = cap <= 80 * 1024 * 1024
    vmem_limit = min((cap * 3) // 4, 96 * 1024 * 1024)        # Mosaic headroom
    budget = min(vmem_limit - 8 * 1024 * 1024, 64 * 1024 * 1024)
    return budget, vmem_limit, two_cores


def _choose_tile_p(hw, cx, c2, ci, cg, itemsize, *, budget_bytes, max_tile=32768):
    """Largest lane tile (multiple of 128) whose estimated VMEM use fits."""
    def vmem_estimate(tp):
        stream = 2 * tp * (cx + c2 + cg) * itemsize           # 2x-buffered x / g(phi) / out
        weights = (ci * cx + ci * cg + cg * cx) * itemsize + (2 * ci + 1 + cg) * 4
        interm = tp * (2 * ci + 1 + cx + cg) * 4               # f32 intermediates
        return stream + weights + interm

    if hw <= 128:
        return hw                                     # full extent satisfies (8,128) rule
    tp = min(max_tile, (hw // 128) * 128)
    while tp > 128 and vmem_estimate(tp) > budget_bytes:
        tp -= 128
    return tp


# -----------------------------------------------------------------------------
# pallas_call wrapper (operates on (N, C, H*W) views)
# -----------------------------------------------------------------------------
def _attention_gate_pallas(x3, second3, params, *, phi_precomputed,
                           budget_bytes, vmem_limit_bytes, two_cores,
                           tile_p=None):
    N, Cx, HW = x3.shape
    _, C2, _ = second3.shape                    # Cg (fused) or Ci (pre-phi)
    Ci = params["w_theta"].shape[0]
    Cg = params["w_out"].shape[0]
    dtype = x3.dtype

    if tile_p is None:
        tile_p = _choose_tile_p(HW, Cx, C2, Ci, Cg, dtype.itemsize,
                                budget_bytes=budget_bytes)
        # Only 2-TensorCore chips (v7x) benefit from forcing >= 2 grid steps
        # when N == 1; on single-TC chips the split is pure overhead.
        if two_cores and N == 1 and HW >= 2 * 128 and pl.cdiv(HW, tile_p) < 2:
            tile_p = max(128, (pl.cdiv(HW, 2) // 128) * 128)

    grid = (N, pl.cdiv(HW, tile_p))             # no host pad; Pallas masks the tail

    # Tiny host-side weight prep: kernel dtype / shapes, biases folded, f32 biases.
    wtx = params["w_theta"].astype(dtype)                                   # (Ci, Cx)
    wout = params["w_out"].astype(dtype)                                    # (Cg, Cx)
    b_comb = (params["b_theta"] + params["b_phi"]).reshape(Ci, 1).astype(jnp.float32)
    w_psi_col = params["w_psi"].reshape(Ci, 1).astype(jnp.float32)
    b_psi = params["b_psi"].reshape(1, 1).astype(jnp.float32)
    b_out = params["b_out"].reshape(Cg, 1).astype(jnp.float32)

    def pix_spec(c):
        return pl.BlockSpec((1, c, tile_p), lambda n, p: (n, 0, p))

    def build_call(single_buffer_consts):
        const_kwargs = {}
        if single_buffer_consts and hasattr(pl, "Buffered"):
            const_kwargs = dict(pipeline_mode=pl.Buffered(1))

        def const_spec(shape):
            # Grid-constant block: fetched once; single-buffered to save VMEM.
            return pl.BlockSpec(shape, lambda n, p: (0, 0), **const_kwargs)

        if phi_precomputed:
            kernel = _kernel_pre_phi
            in_specs = [
                pix_spec(Cx),                  # x
                pix_spec(Ci),                  # phi (upsampled, bias not yet added)
                const_spec((Ci, Cx)),          # w_theta
                const_spec((Ci, 1)),           # b_theta + b_phi (folded)
                const_spec((Ci, 1)),           # w_psi (column)
                const_spec((1, 1)),            # b_psi
                const_spec((Cg, Cx)),          # w_out
                const_spec((Cg, 1)),           # b_out
            ]
            args = (x3, second3, wtx, b_comb, w_psi_col, b_psi, wout, b_out)
        else:
            wpg = params["w_phi"].astype(dtype)                             # (Ci, Cg)
            kernel = _kernel_fused_phi
            in_specs = [
                pix_spec(Cx),                  # x
                pix_spec(C2),                  # g (already at x's resolution)
                const_spec((Ci, Cx)),          # w_theta
                const_spec((Ci, Cg)),          # w_phi
                const_spec((Ci, 1)),           # b_theta + b_phi (folded)
                const_spec((Ci, 1)),           # w_psi (column)
                const_spec((1, 1)),            # b_psi
                const_spec((Cg, Cx)),          # w_out
                const_spec((Cg, 1)),           # b_out
            ]
            args = (x3, second3, wtx, wpg, b_comb, w_psi_col, b_psi, wout, b_out)

        call = pl.pallas_call(
            kernel,
            out_shape=jax.ShapeDtypeStruct((N, Cg, HW), dtype),
            grid_spec=pltpu.PrefetchScalarGridSpec(
                num_scalar_prefetch=0,
                grid=grid,
                in_specs=in_specs,
                out_specs=pix_spec(Cg),
            ),
            compiler_params=pltpu.CompilerParams(
                dimension_semantics=("parallel", "parallel"),
                vmem_limit_bytes=int(vmem_limit_bytes),
            ),
        )
        return call, args

    call, args = build_call(single_buffer_consts=True)
    try:
        return call(*args)
    except Exception:
        # Fallback for jax versions that reject Buffered(1) constant specs.
        call, args = build_call(single_buffer_consts=False)
        return call(*args)


# -----------------------------------------------------------------------------
# Public forward pass (NCHW in, NCHW out), matching the PyTorch AttentionGate.
# -----------------------------------------------------------------------------
def attention_gate(x_nchw, g_nchw, params, *, io_dtype=None):
    """io_dtype: optionally run kernel I/O in bf16 (mem-bound ~2x) if accuracy allows."""
    N, Cx, H, W = x_nchw.shape
    _, Cg, Hg, Wg = g_nchw.shape
    Ci = params["w_theta"].shape[0]
    dtype = x_nchw.dtype if io_dtype is None else jnp.dtype(io_dtype)

    budget_bytes, vmem_limit_bytes, two_cores = _vmem_plan()

    HW = H * W
    x3 = x_nchw.astype(dtype).reshape(N, Cx, HW)       # free contiguous reshape

    if (Hg, Wg) != (H, W) and Ci <= Cg:
        # Commute the 1x1 conv with the (linear) bilinear upsample:
        # W_phi @ resize(g) == resize(W_phi @ g).  Materializing (N, Ci, H, W)
        # instead of (N, Cg, H, W) cuts HBM traffic whenever Ci <= Cg and the
        # phi matmul runs at the low resolution (4x fewer FLOPs for 2x upsample).
        phi_low = jnp.einsum("oc,nchw->nohw",
                             params["w_phi"].astype(jnp.float32),
                             g_nchw.astype(jnp.float32),
                             precision=jax.lax.Precision.HIGHEST)
        phi = jax.image.resize(phi_low, (N, Ci, H, W), method="bilinear",
                               antialias=False)
        second3 = phi.astype(dtype).reshape(N, Ci, HW)
        phi_precomputed = True
    else:
        if (Hg, Wg) != (H, W):
            # TODO(synk): fully fusing the bilinear resize into the kernel needs
            # 2-D (H, W) tiling + in-kernel VPU interpolation; it stays as a
            # wrapper-level jax.image.resize when Ci > Cg.
            g_nchw = jax.image.resize(g_nchw, (N, Cg, H, W), method="bilinear",
                                      antialias=False)
        second3 = g_nchw.astype(dtype).reshape(N, Cg, HW)
        phi_precomputed = False

    out3 = _attention_gate_pallas(x3, second3, params,
                                  phi_precomputed=phi_precomputed,
                                  budget_bytes=budget_bytes,
                                  vmem_limit_bytes=vmem_limit_bytes,
                                  two_cores=two_cores)
    return out3.reshape(N, Cg, H, W).astype(x_nchw.dtype)


# -----------------------------------------------------------------------------
# Parameters (mirror nn.Conv2d 1x1 weights: (C_out, C_in), biases as (C_out, 1))
# -----------------------------------------------------------------------------
def init_params(key, x_channels, g_channels, inter_channels, dtype=jnp.float32):
    ks = jax.random.split(key, 8)

    def w(k, cout, cin):
        return (jax.random.normal(k, (cout, cin), jnp.float32)
                / jnp.sqrt(cin)).astype(dtype)

    def b(k, cout):
        return (jax.random.normal(k, (cout, 1), jnp.float32) * 0.01).astype(dtype)

    return {
        "w_theta": w(ks[0], inter_channels, x_channels),
        "b_theta": b(ks[1], inter_channels),
        "w_phi":   w(ks[2], inter_channels, g_channels),
        "b_phi":   b(ks[3], inter_channels),
        "w_psi":   w(ks[4], 1, inter_channels),
        "b_psi":   b(ks[5], 1),
        "w_out":   w(ks[6], g_channels, x_channels),
        "b_out":   b(ks[7], g_channels),
    }


# -----------------------------------------------------------------------------
# Pure-JAX reference of the same forward pass (for sanity check)
# -----------------------------------------------------------------------------
def _reference(x_nchw, g_nchw, params):
    N, Cx, H, W = x_nchw.shape
    _, Cg, Hg, Wg = g_nchw.shape
    if (Hg, Wg) != (H, W):
        g_nchw = jax.image.resize(g_nchw, (N, Cg, H, W), method="bilinear",
                                  antialias=False)

    def conv1x1(t, w, b):      # w: (Cout, Cin), b: (Cout, 1)
        y = jnp.einsum("oc,nchw->nohw", w, t,
                       precision=jax.lax.Precision.HIGHEST)
        return y + b.reshape(1, -1, 1, 1)

    theta = conv1x1(x_nchw, params["w_theta"], params["b_theta"])
    phi = conv1x1(g_nchw, params["w_phi"], params["b_phi"])
    combined = jax.nn.relu(theta + phi)
    psi = jax.nn.sigmoid(conv1x1(combined, params["w_psi"], params["b_psi"]))
    return conv1x1(x_nchw * psi, params["w_out"], params["b_out"])


if __name__ == "__main__":
    key = jax.random.PRNGKey(0)

    # (N, Cx, Cg, Ci, H, W, g_downscale)
    configs = [
        (2, 4, 6, 8, 16, 16, 2),   # resize path, Ci > Cg  -> g resized, phi in-kernel
        (2, 4, 8, 4, 16, 16, 2),   # resize path, Ci <= Cg -> commuted pre-kernel phi
        (1, 4, 6, 8, 16, 16, 1),   # no resize, N == 1 (2-TC split only on v7x)
    ]

    for idx, (N, Cx, Cg, Ci, H, W, s) in enumerate(configs):
        k_x, k_g, k_p, key = jax.random.split(key, 4)
        x = jax.random.normal(k_x, (N, Cx, H, W), jnp.float32)
        g = jax.random.normal(k_g, (N, Cg, H // s, W // s), jnp.float32)
        params = init_params(k_p, Cx, Cg, Ci)

        out = jax.block_until_ready(attention_gate(x, g, params))
        ref = _reference(x, g, params)

        assert out.shape == (N, Cg, H, W), (idx, out.shape)
        assert jnp.allclose(out, ref, atol=1e-4, rtol=1e-4), f"mismatch in config {idx}"

    print("KERNEL_OK")
</pallas_src>

<mosaic_0001>
module attributes {stable_mosaic.version = 11 : i64} {
  func.func @_kernel_fused_phi(%arg0: i32, %arg1: i32, %arg2: memref<1x4x256xf32, #tpu.memory_space<vmem>>, %arg3: memref<1x6x256xf32, #tpu.memory_space<vmem>>, %arg4: memref<8x4xf32, #tpu.memory_space<vmem>>, %arg5: memref<8x6xf32, #tpu.memory_space<vmem>>, %arg6: memref<8x1xf32, #tpu.memory_space<vmem>>, %arg7: memref<8x1xf32, #tpu.memory_space<vmem>>, %arg8: memref<1x1xf32, #tpu.memory_space<vmem>>, %arg9: memref<6x4xf32, #tpu.memory_space<vmem>>, %arg10: memref<6x1xf32, #tpu.memory_space<vmem>>, %arg11: memref<1x6x256xf32, #tpu.memory_space<vmem>>) attributes {dimension_semantics = [#tpu.dimension_semantics<parallel>, #tpu.dimension_semantics<parallel>], iteration_bounds = array<i64: 2, 1>, scalar_prefetch = 0 : i64, scratch_operands = 0 : i64, tpu.core_type = #tpu.core_type<tc>, window_params = [{transform_indices = @transform_0, window_bounds = array<i64: 1, 4, 256>}, {transform_indices = @transform_1, window_bounds = array<i64: 1, 6, 256>}, {pipeline_mode = #tpu.pipeline_mode<synchronous>, transform_indices = @transform_2, window_bounds = array<i64: 8, 4>}, {pipeline_mode = #tpu.pipeline_mode<synchronous>, transform_indices = @transform_3, window_bounds = array<i64: 8, 6>}, {pipeline_mode = #tpu.pipeline_mode<synchronous>, transform_indices = @transform_4, window_bounds = array<i64: 8, 1>}, {pipeline_mode = #tpu.pipeline_mode<synchronous>, transform_indices = @transform_5, window_bounds = array<i64: 8, 1>}, {pipeline_mode = #tpu.pipeline_mode<synchronous>, transform_indices = @transform_6, window_bounds = array<i64: 1, 1>}, {pipeline_mode = #tpu.pipeline_mode<synchronous>, transform_indices = @transform_7, window_bounds = array<i64: 6, 4>}, {pipeline_mode = #tpu.pipeline_mode<synchronous>, transform_indices = @transform_8, window_bounds = array<i64: 6, 1>}, {transform_indices = @transform_9, window_bounds = array<i64: 1, 6, 256>}]} {
    %c0 = arith.constant 0 : index
    %c0_0 = arith.constant 0 : index
    %c0_1 = arith.constant 0 : index
    %0 = vector.load %arg2[%c0, %c0_0, %c0_1] : memref<1x4x256xf32, #tpu.memory_space<vmem>>, vector<1x4x256xf32>
    %1 = vector.shape_cast %0 : vector<1x4x256xf32> to vector<4x256xf32>
    %c0_2 = arith.constant 0 : index
    %c0_3 = arith.constant 0 : index
    %2 = vector.load %arg5[%c0_2, %c0_3] : memref<8x6xf32, #tpu.memory_space<vmem>>, vector<8x6xf32>
    %c0_4 = arith.constant 0 : index
    %c0_5 = arith.constant 0 : index
    %c0_6 = arith.constant 0 : index
    %3 = vector.load %arg3[%c0_4, %c0_5, %c0_6] : memref<1x6x256xf32, #tpu.memory_space<vmem>>, vector<1x6x256xf32>
    %4 = vector.shape_cast %3 : vector<1x6x256xf32> to vector<6x256xf32>
    %cst = arith.constant dense<0.000000e+00> : vector<8x256xf32>
    %5 = tpu.matmul %2, %4, %cst {dimension_numbers = #tpu.dot_dimension_numbers<[1], [0], [0], [1], [0, 0, 1, 1], [], []>} : vector<8x6xf32>, vector<6x256xf32>, vector<8x256xf32> -> vector<8x256xf32>
    %c0_7 = arith.constant 0 : index
    %c0_8 = arith.constant 0 : index
    %6 = vector.load %arg4[%c0_7, %c0_8] : memref<8x4xf32, #tpu.memory_space<vmem>>, vector<8x4xf32>
    %c0_9 = arith.constant 0 : index
    %c0_10 = arith.constant 0 : index
    %7 = vector.load %arg6[%c0_9, %c0_10] : memref<8x1xf32, #tpu.memory_space<vmem>>, vector<8x1xf32>
    %c0_11 = arith.constant 0 : index
    %c0_12 = arith.constant 0 : index
    %8 = vector.load %arg7[%c0_11, %c0_12] : memref<8x1xf32, #tpu.memory_space<vmem>>, vector<8x1xf32>
    %c0_13 = arith.constant 0 : index
    %c0_14 = arith.constant 0 : index
    %9 = vector.load %arg8[%c0_13, %c0_14] : memref<1x1xf32, #tpu.memory_space<vmem>>, vector<1x1xf32>
    %c0_15 = arith.constant 0 : index
    %c0_16 = arith.constant 0 : index
    %10 = vector.load %arg9[%c0_15, %c0_16] : memref<6x4xf32, #tpu.memory_space<vmem>>, vector<6x4xf32>
    %c0_17 = arith.constant 0 : index
    %c0_18 = arith.constant 0 : index
    %11 = vector.load %arg10[%c0_17, %c0_18] : memref<6x1xf32, #tpu.memory_space<vmem>>, vector<6x1xf32>
    %cst_19 = arith.constant dense<0.000000e+00> : vector<8x256xf32>
    %12 = tpu.matmul %6, %1, %cst_19 {dimension_numbers = #tpu.dot_dimension_numbers<[1], [0], [0], [1], [0, 0, 1, 1], [], []>} : vector<8x4xf32>, vector<4x256xf32>, vector<8x256xf32> -> vector<8x256xf32>
    %13 = arith.addf %12, %5 : vector<8x256xf32>
    %14 = vector.broadcast %7 : vector<8x1xf32> to vector<8x256xf32>
    %15 = arith.addf %13, %14 : vector<8x256xf32>
    %cst_20 = arith.constant 0.000000e+00 : f32
    %16 = vector.broadcast %cst_20 : f32 to vector<8x256xf32>
    %17 = arith.maximumf %15, %16 : vector<8x256xf32>
    %18 = vector.broadcast %8 : vector<8x1xf32> to vector<8x256xf32>
    %19 = arith.mulf %17, %18 : vector<8x256xf32>
    %cst_21 = arith.constant dense<0.000000e+00> : vector<256xf32>
    %20 = vector.multi_reduction <add>, %19, %cst_21 [0] : vector<8x256xf32> to vector<256xf32>
    %21 = vector.shape_cast %20 : vector<256xf32> to vector<1x256xf32>
    %22 = vector.broadcast %9 : vector<1x1xf32> to vector<1x256xf32>
    %23 = arith.addf %21, %22 : vector<1x256xf32>
    %24 = arith.negf %23 : vector<1x256xf32>
    %25 = math.exp %24 : vector<1x256xf32>
    %cst_22 = arith.constant 1.000000e+00 : f32
    %26 = vector.broadcast %cst_22 : f32 to vector<1x256xf32>
    %27 = arith.addf %26, %25 : vector<1x256xf32>
    %28 = arith.divf %26, %27 : vector<1x256xf32>
    %29 = vector.broadcast %28 : vector<1x256xf32> to vector<4x256xf32>
    %30 = arith.mulf %1, %29 : vector<4x256xf32>
    %cst_23 = arith.constant dense<0.000000e+00> : vector<6x256xf32>
    %31 = tpu.matmul %10, %30, %cst_23 {dimension_numbers = #tpu.dot_dimension_numbers<[1], [0], [0], [1], [0, 0, 1, 1], [], []>} : vector<6x4xf32>, vector<4x256xf32>, vector<6x256xf32> -> vector<6x256xf32>
    %32 = vector.broadcast %11 : vector<6x1xf32> to vector<6x256xf32>
    %33 = arith.addf %31, %32 : vector<6x256xf32>
    %c0_24 = arith.constant 0 : index
    %c0_25 = arith.constant 0 : index
    %c0_26 = arith.constant 0 : index
    %34 = vector.load %arg11[%c0_24, %c0_25, %c0_26] : memref<1x6x256xf32, #tpu.memory_space<vmem>>, vector<1x6x256xf32>
    %35 = vector.shape_cast %34 : vector<1x6x256xf32> to vector<6x256xf32>
    %36 = vector.shape_cast %33 : vector<6x256xf32> to vector<1x6x256xf32>
    tpu.vector_store %arg11[%c0_24, %c0_25, %c0_26], %36 {strides = array<i32>} : memref<1x6x256xf32, #tpu.memory_space<vmem>>, vector<1x6x256xf32>,
    return
  }
  func.func @transform_0(%arg0: i32, %arg1: i32) -> (i32, i32, i32) {
    %c0_i32 = arith.constant 0 : i32
    %c0_i32_0 = arith.constant 0 : i32
    return %arg0, %c0_i32, %arg1 : i32, i32, i32
  }
  func.func @transform_1(%arg0: i32, %arg1: i32) -> (i32, i32, i32) {
    %c0_i32 = arith.constant 0 : i32
    %c0_i32_0 = arith.constant 0 : i32
    return %arg0, %c0_i32, %arg1 : i32, i32, i32
  }
  func.func @transform_2(%arg0: i32, %arg1: i32) -> (i32, i32) {
    %c0_i32 = arith.constant 0 : i32
    %c0_i32_0 = arith.constant 0 : i32
    %c0_i32_1 = arith.constant 0 : i32
    return %c0_i32, %c0_i32_0 : i32, i32
  }
  func.func @transform_3(%arg0: i32, %arg1: i32) -> (i32, i32) {
    %c0_i32 = arith.constant 0 : i32
    %c0_i32_0 = arith.constant 0 : i32
    %c0_i32_1 = arith.constant 0 : i32
    return %c0_i32, %c0_i32_0 : i32, i32
  }
  func.func @transform_4(%arg0: i32, %arg1: i32) -> (i32, i32) {
    %c0_i32 = arith.constant 0 : i32
    %c0_i32_0 = arith.constant 0 : i32
    %c0_i32_1 = arith.constant 0 : i32
    return %c0_i32, %c0_i32_0 : i32, i32
  }
  func.func @transform_5(%arg0: i32, %arg1: i32) -> (i32, i32) {
    %c0_i32 = arith.constant 0 : i32
    %c0_i32_0 = arith.constant 0 : i32
    %c0_i32_1 = arith.constant 0 : i32
    return %c0_i32, %c0_i32_0 : i32, i32
  }
  func.func @transform_6(%arg0: i32, %arg1: i32) -> (i32, i32) {
    %c0_i32 = arith.constant 0 : i32
    %c0_i32_0 = arith.constant 0 : i32
    %c0_i32_1 = arith.constant 0 : i32
    return %c0_i32, %c0_i32_0 : i32, i32
  }
  func.func @transform_7(%arg0: i32, %arg1: i32) -> (i32, i32) {
    %c0_i32 = arith.constant 0 : i32
    %c0_i32_0 = arith.constant 0 : i32
    %c0_i32_1 = arith.constant 0 : i32
    return %c0_i32, %c0_i32_0 : i32, i32
  }
  func.func @transform_8(%arg0: i32, %arg1: i32) -> (i32, i32) {
    %c0_i32 = arith.constant 0 : i32
    %c0_i32_0 = arith.constant 0 : i32
    %c0_i32_1 = arith.constant 0 : i32
    return %c0_i32, %c0_i32_0 : i32, i32
  }
  func.func @transform_9(%arg0: i32, %arg1: i32) -> (i32, i32, i32) {
    %c0_i32 = arith.constant 0 : i32
    %c0_i32_0 = arith.constant 0 : i32
    return %arg0, %c0_i32, %arg1 : i32, i32, i32
  }
}

module attributes {stable_mosaic.version = 11 : i64} {
  func.func @_kernel_fused_phi(%arg0: i32, %arg1: i32, %arg2: memref<1x4x256xf32, #tpu.memory_space<vmem>>, %arg3: memref<1x6x256xf32, #tpu.memory_space<vmem>>, %arg4: memref<8x4xf32, #tpu.memory_space<vmem>>, %arg5: memref<8x6xf32, #tpu.memory_space<vmem>>, %arg6: memref<8x1xf32, #tpu.memory_space<vmem>>, %arg7: memref<8x1xf32, #tpu.memory_space<vmem>>, %arg8: memref<1x1xf32, #tpu.memory_space<vmem>>, %arg9: memref<6x4xf32, #tpu.memory_space<vmem>>, %arg10: memref<6x1xf32, #tpu.memory_space<vmem>>, %arg11: memref<1x6x256xf32, #tpu.memory_space<vmem>>) attributes {dimension_semantics = [#tpu.dimension_semantics<parallel>, #tpu.dimension_semantics<parallel>], iteration_bounds = array<i64: 2, 1>, scalar_prefetch = 0 : i64, scratch_operands = 0 : i64, tpu.core_type = #tpu.core_type<tc>, window_params = [{transform_indices = @transform_0, window_bounds = array<i64: 1, 4, 256>}, {transform_indices = @transform_1, window_bounds = array<i64: 1, 6, 256>}, {pipeline_mode = #tpu.pipeline_mode<synchronous>, transform_indices = @transform_2, window_bounds = array<i64: 8, 4>}, {pipeline_mode = #tpu.pipeline_mode<synchronous>, transform_indices = @transform_3, window_bounds = array<i64: 8, 6>}, {pipeline_mode = #tpu.pipeline_mode<synchronous>, transform_indices = @transform_4, window_bounds = array<i64: 8, 1>}, {pipeline_mode = #tpu.pipeline_mode<synchronous>, transform_indices = @transform_5, window_bounds = array<i64: 8, 1>}, {pipeline_mode = #tpu.pipeline_mode<synchronous>, transform_indices = @transform_6, window_bounds = array<i64: 1, 1>}, {pipeline_mode = #tpu.pipeline_mode<synchronous>, transform_indices = @transform_7, window_bounds = array<i64: 6, 4>}, {pipeline_mode = #tpu.pipeline_mode<synchronous>, transform_indices = @transform_8, window_bounds = array<i64: 6, 1>}, {transform_indices = @transform_9, window_bounds = array<i64: 1, 6, 256>}]} {
    %c0 = arith.constant 0 : index
    %c0_0 = arith.constant 0 : index
    %c0_1 = arith.constant 0 : index
    %0 = vector.load %arg2[%c0, %c0_0, %c0_1] : memref<1x4x256xf32, #tpu.memory_space<vmem>>, vector<1x4x256xf32>
    %1 = vector.shape_cast %0 : vector<1x4x256xf32> to vector<4x256xf32>
    %c0_2 = arith.constant 0 : index
    %c0_3 = arith.constant 0 : index
    %2 = vector.load %arg5[%c0_2, %c0_3] : memref<8x6xf32, #tpu.memory_space<vmem>>, vector<8x6xf32>
    %c0_4 = arith.constant 0 : index
    %c0_5 = arith.constant 0 : index
    %c0_6 = arith.constant 0 : index
    %3 = vector.load %arg3[%c0_4, %c0_5, %c0_6] : memref<1x6x256xf32, #tpu.memory_space<vmem>>, vector<1x6x256xf32>
    %4 = vector.shape_cast %3 : vector<1x6x256xf32> to vector<6x256xf32>
    %cst = arith.constant dense<0.000000e+00> : vector<8x256xf32>
    %5 = tpu.matmul %2, %4, %cst {dimension_numbers = #tpu.dot_dimension_numbers<[1], [0], [0], [1], [0, 0, 1, 1], [], []>} : vector<8x6xf32>, vector<6x256xf32>, vector<8x256xf32> -> vector<8x256xf32>
    %c0_7 = arith.constant 0 : index
    %c0_8 = arith.constant 0 : index
    %6 = vector.load %arg4[%c0_7, %c0_8] : memref<8x4xf32, #tpu.memory_space<vmem>>, vector<8x4xf32>
    %c0_9 = arith.constant 0 : index
    %c0_10 = arith.constant 0 : index
    %7 = vector.load %arg6[%c0_9, %c0_10] : memref<8x1xf32, #tpu.memory_space<vmem>>, vector<8x1xf32>
    %c0_11 = arith.constant 0 : index
    %c0_12 = arith.constant 0 : index
    %8 = vector.load %arg7[%c0_11, %c0_12] : memref<8x1xf32, #tpu.memory_space<vmem>>, vector<8x1xf32>
    %c0_13 = arith.constant 0 : index
    %c0_14 = arith.constant 0 : index
    %9 = vector.load %arg8[%c0_13, %c0_14] : memref<1x1xf32, #tpu.memory_space<vmem>>, vector<1x1xf32>
    %c0_15 = arith.constant 0 : index
    %c0_16 = arith.constant 0 : index
    %10 = vector.load %arg9[%c0_15, %c0_16] : memref<6x4xf32, #tpu.memory_space<vmem>>, vector<6x4xf32>
    %c0_17 = arith.constant 0 : index
    %c0_18 = arith.constant 0 : index
    %11 = vector.load %arg10[%c0_17, %c0_18] : memref<6x1xf32, #tpu.memory_space<vmem>>, vector<6x1xf32>
    %cst_19 = arith.constant dense<0.000000e+00> : vector<8x256xf32>
    %12 = tpu.matmul %6, %1, %cst_19 {dimension_numbers = #tpu.dot_dimension_numbers<[1], [0], [0], [1], [0, 0, 1, 1], [], []>} : vector<8x4xf32>, vector<4x256xf32>, vector<8x256xf32> -> vector<8x256xf32>
    %13 = arith.addf %12, %5 : vector<8x256xf32>
    %14 = vector.broadcast %7 : vector<8x1xf32> to vector<8x256xf32>
    %15 = arith.addf %13, %14 : vector<8x256xf32>
    %cst_20 = arith.constant 0.000000e+00 : f32
    %16 = vector.broadcast %cst_20 : f32 to vector<8x256xf32>
    %17 = arith.maximumf %15, %16 : vector<8x256xf32>
    %18 = vector.broadcast %8 : vector<8x1xf32> to vector<8x256xf32>
    %19 = arith.mulf %17, %18 : vector<8x256xf32>
    %cst_21 = arith.constant dense<0.000000e+00> : vector<256xf32>
    %20 = vector.multi_reduction <add>, %19, %cst_21 [0] : vector<8x256xf32> to vector<256xf32>
    %21 = vector.shape_cast %20 : vector<256xf32> to vector<1x256xf32>
    %22 = vector.broadcast %9 : vector<1x1xf32> to vector<1x256xf32>
    %23 = arith.addf %21, %22 : vector<1x256xf32>
    %24 = arith.negf %23 : vector<1x256xf32>
    %25 = math.exp %24 : vector<1x256xf32>
    %cst_22 = arith.constant 1.000000e+00 : f32
    %26 = vector.broadcast %cst_22 : f32 to vector<1x256xf32>
    %27 = arith.addf %26, %25 : vector<1x256xf32>
    %28 = arith.divf %26, %27 : vector<1x256xf32>
    %29 = vector.broadcast %28 : vector<1x256xf32> to vector<4x256xf32>
    %30 = arith.mulf %1, %29 : vector<4x256xf32>
    %cst_23 = arith.constant dense<0.000000e+00> : vector<6x256xf32>
    %31 = tpu.matmul %10, %30, %cst_23 {dimension_numbers = #tpu.dot_dimension_numbers<[1], [0], [0], [1], [0, 0, 1, 1], [], []>} : vector<6x4xf32>, vector<4x256xf32>, vector<6x256xf32> -> vector<6x256xf32>
    %32 = vector.broadcast %11 : vector<6x1xf32> to vector<6x256xf32>
    %33 = arith.addf %31, %32 : vector<6x256xf32>
    %c0_24 = arith.constant 0 : index
    %c0_25 = arith.constant 0 : index
    %c0_26 = arith.constant 0 : index
    %34 = vector.load %arg11[%c0_24, %c0_25, %c0_26] : memref<1x6x256xf32, #tpu.memory_space<vmem>>, vector<1x6x256xf32>
    %35 = vector.shape_cast %34 : vector<1x6x256xf32> to vector<6x256xf32>
    %36 = vector.shape_cast %33 : vector<6x256xf32> to vector<1x6x256xf32>
    tpu.vector_store %arg11[%c0_24, %c0_25, %c0_26], %36 {strides = array<i32>} : memref<1x6x256xf32, #tpu.memory_space<vmem>>, vector<1x6x256xf32>,
    return
  }
  func.func @transform_0(%arg0: i32, %arg1: i32) -> (i32, i32, i32) {
    %c0_i32 = arith.constant 0 : i32
    %c0_i32_0 = arith.constant 0 : i32
    return %arg0, %c0_i32, %arg1 : i32, i32, i32
  }
  func.func @transform_1(%arg0: i32, %arg1: i32) -> (i32, i32, i32) {
    %c0_i32 = arith.constant 0 : i32
    %c0_i32_0 = arith.constant 0 : i32
    return %arg0, %c0_i32, %arg1 : i32, i32, i32
  }
  func.func @transform_2(%arg0: i32, %arg1: i32) -> (i32, i32) {
    %c0_i32 = arith.constant 0 : i32
    %c0_i32_0 = arith.constant 0 : i32
    %c0_i32_1 = arith.constant 0 : i32
    return %c0_i32, %c0_i32_0 : i32, i32
  }
  func.func @transform_3(%arg0: i32, %arg1: i32) -> (i32, i32) {
    %c0_i32 = arith.constant 0 : i32
    %c0_i32_0 = arith.constant 0 : i32
    %c0_i32_1 = arith.constant 0 : i32
    return %c0_i32, %c0_i32_0 : i32, i32
  }
  func.func @transform_4(%arg0: i32, %arg1: i32) -> (i32, i32) {
    %c0_i32 = arith.constant 0 : i32
    %c0_i32_0 = arith.constant 0 : i32
    %c0_i32_1 = arith.constant 0 : i32
    return %c0_i32, %c0_i32_0 : i32, i32
  }
  func.func @transform_5(%arg0: i32, %arg1: i32) -> (i32, i32) {
    %c0_i32 = arith.constant 0 : i32
    %c0_i32_0 = arith.constant 0 : i32
    %c0_i32_1 = arith.constant 0 : i32
    return %c0_i32, %c0_i32_0 : i32, i32
  }
  func.func @transform_6(%arg0: i32, %arg1: i32) -> (i32, i32) {
    %c0_i32 = arith.constant 0 : i32
    %c0_i32_0 = arith.constant 0 : i32
    %c0_i32_1 = arith.constant 0 : i32
    return %c0_i32, %c0_i32_0 : i32, i32
  }
  func.func @transform_7(%arg0: i32, %arg1: i32) -> (i32, i32) {
    %c0_i32 = arith.constant 0 : i32
    %c0_i32_0 = arith.constant 0 : i32
    %c0_i32_1 = arith.constant 0 : i32
    return %c0_i32, %c0_i32_0 : i32, i32
  }
  func.func @transform_8(%arg0: i32, %arg1: i32) -> (i32, i32) {
    %c0_i32 = arith.constant 0 : i32
    %c0_i32_0 = arith.constant 0 : i32
    %c0_i32_1 = arith.constant 0 : i32
    return %c0_i32, %c0_i32_0 : i32, i32
  }
  func.func @transform_9(%arg0: i32, %arg1: i32) -> (i32, i32, i32) {
    %c0_i32 = arith.constant 0 : i32
    %c0_i32_0 = arith.constant 0 : i32
    return %arg0, %c0_i32, %arg1 : i32, i32, i32
  }
}

</mosaic_0001>

<llo_original>
// kernel: tpu_custom_call.1
$region0: #{tpu_custom_call.1}
  #allocation0 [shape = 'u32[]', space=smem, size = 0x4, offset = 0x4, fixed_abs, tag = 'smem constant byte address 0x4 - core index']
  #allocation1 [shape = 'u32[72,128]{1,0:T(1,128)}', space=vmem, size = 0x9000, scoped, tag = 'internal scratch']
  #allocation2 [shape = 'f32[1,1]{1,0:T(1,128)S(1)}', space=vmem, size = 0x200, scoped, tag = 'scoped memory for tpu_custom_call.1']
  %s0 = inlined_call_operand.vmem [shape: f32[2,4,256], index: 0, kind: input, shape index: {}]
  %s1 = inlined_call_operand.vmem [shape: f32[2,6,256], index: 1, kind: input, shape index: {}]
  %s2 = inlined_call_operand.vmem [shape: f32[8,4], index: 2, kind: input, shape index: {}]
  %s3 = inlined_call_operand.vmem [shape: f32[8,6], index: 3, kind: input, shape index: {}]
  %s4 = inlined_call_operand.vmem [shape: f32[8,1], index: 4, kind: input, shape index: {}]
  %s5 = inlined_call_operand.vmem [shape: f32[8,1], index: 5, kind: input, shape index: {}]
  %s6 = inlined_call_operand.<no memory space> [shape: f32[1,1], index: 6, kind: input, shape index: {}]
  %s7 = inlined_call_operand.vmem [shape: f32[6,4], index: 7, kind: input, shape index: {}]
  %s8 = inlined_call_operand.vmem [shape: f32[6,1], index: 8, kind: input, shape index: {}]
  %s9 = inlined_call_operand.vmem [shape: f32[2,6,256], index: 9, kind: output, shape index: {}]
  %s10 = sld [smem:[#allocation0]]
  $region69: #{tpu_custom_call.1} parent=0
    _
  %s12 = ssub.s32 1, %s10
  %s13 = scalar_select 0, %s12, %s10
  %v14 = vstv %s6
  %15 = vst [vmem:[#allocation2] sm:$0x1] %v14
  loop: start=0, step=1, limit=4
  $region2: #{tpu_custom_call.1} parent=0 // loop_pre_header
    _
  $region3: #{tpu_custom_call.1} parent=0 // loop_header
    %s17 = sphi 0, %s21
    %p18 = scmp.ge.s32.totalorder %s17, 4
    %s24 = sphi 0, %s36
    %s25 = sphi 0, %s32
    %s26 = sphi 0, %s24
    %s27 = sphi 0, %s25
    %s28 = sphi 0, %s26
    %s29 = sphi 0, %s27
    %s41 = sphi 0, %s43
    %s44 = sphi 0, %s41
    %s45 = sphi 0, %s44
    %s61 = sphi 0, %s45
    %s69 = sphi 0, %s71
    %s72 = sphi 0, %s69
    %s73 = sphi 0, %s72
    %s89 = sphi 0, %s73
    %s93 = sphi 0, %s93
    %s95 = sphi 0, %s93
    %s96 = sphi 0, %s95
    %s110 = sphi 0, %s96
    %s114 = sphi 0, %s114
    %s116 = sphi 0, %s114
    %s117 = sphi 0, %s116
    %s131 = sphi 0, %s117
    %s135 = sphi 0, %s135
    %s137 = sphi 0, %s135
    %s138 = sphi 0, %s137
    %s152 = sphi 0, %s138
    %s156 = sphi 0, %s156
    %s158 = sphi 0, %s156
    %s159 = sphi 0, %s158
    %s173 = sphi 0, %s159
    %s177 = sphi 0, %s177
    %s179 = sphi 0, %s177
    %s180 = sphi 0, %s179
    %s194 = sphi 0, %s180
    %s198 = sphi 0, %s198
    %s200 = sphi 0, %s198
    %s201 = sphi 0, %s200
    %s215 = sphi 0, %s201
    %s219 = sphi 0, %s219
    %s221 = sphi 0, %s219
    %s222 = sphi 0, %s221
    %s236 = sphi 0, %s222
    %s244 = sphi 0, %s246
    %s247 = sphi 0, %s244
    %s248 = sphi 0, %s247
    %s264 = sphi 0, %s248
  $region4: #{tpu_custom_call.1} parent=0 // loop_header_branch
    %20 = sbr.rel (%p18) target = $region8
  $region5: #{tpu_custom_call.1} parent=0 // loop_body
    %s22 = ssub.s32 %s17, 1
    %s23 = ssub.s32 %s17, 2
    %s30 = sadd.s32 1, %s25
    %p31 = scmp.ge.s32.totalorder %s30, 1
    %s32 = scalar_select %p31, 0, %s30
    %s33 = sadd.s32 1, %s24
    %s34 = scalar_select %p31, %s33, %s24
    %p35 = scmp.ge.s32.totalorder %s34, 2
    %s36 = scalar_select %p35, 0, %s34
    %s37 = ssub.s32 %s24, %s36
    %s38 = ssub.s32 %s25, %s32
    %s39 = sor.u32 %s37, %s38
    %p40 = scmp.eq.s32.totalorder %s39, 0
    %s42 = sadd.s32 %s41, 1
    %s43 = scalar_select %p40, %s41, %s42
    %p46 = pneg %p40
    %p47 = scmp.eq.s32.totalorder %s17, 1
    %p48 = por %p46, %p47
    %p49 = scmp.ne.s32.totalorder %s41, %s44
    %p50 = scmp.eq.s32.totalorder %s17, 0
    %p51 = por %p49, %p50
    %p52 = scmp.ne.s32.totalorder %s41, %s44
    %p53 = scmp.eq.s32.totalorder %s22, 1
    %p54 = por %p52, %p53
    %p55 = scmp.ne.s32.totalorder %s44, %s45
    %p56 = scmp.eq.s32.totalorder %s22, 0
    %p57 = por %p55, %p56
    %p58 = scmp.ne.s32.totalorder %s44, %s45
    %p59 = scmp.eq.s32.totalorder %s23, 1
    %p60 = por %p58, %p59
    %p62 = scmp.ne.s32.totalorder %s45, %s61
    %p63 = scmp.eq.s32.totalorder %s23, 0
    %p64 = por %p62, %p63
    %s65 = ssub.s32 %s24, %s36
    %s66 = ssub.s32 %s25, %s32
    %s67 = sor.u32 %s65, %s66
    %p68 = scmp.eq.s32.totalorder %s67, 0
    %s70 = sadd.s32 %s69, 1
    %s71 = scalar_select %p68, %s69, %s70
    %p74 = pneg %p68
    %p75 = scmp.eq.s32.totalorder %s17, 1
    %p76 = por %p74, %p75
    %p77 = scmp.ne.s32.totalorder %s69, %s72
    %p78 = scmp.eq.s32.totalorder %s17, 0
    %p79 = por %p77, %p78
    %p80 = scmp.ne.s32.totalorder %s69, %s72
    %p81 = scmp.eq.s32.totalorder %s22, 1
    %p82 = por %p80, %p81
    %p83 = scmp.ne.s32.totalorder %s72, %s73
    %p84 = scmp.eq.s32.totalorder %s22, 0
    %p85 = por %p83, %p84
    %p86 = scmp.ne.s32.totalorder %s72, %s73
    %p87 = scmp.eq.s32.totalorder %s23, 1
    %p88 = por %p86, %p87
    %p90 = scmp.ne.s32.totalorder %s73, %s89
    %p91 = scmp.eq.s32.totalorder %s23, 0
    %p92 = por %p90, %p91
    %s94 = sadd.s32 %s93, 1
    %p97 = scmp.eq.s32.totalorder %s17, 1
    %p98 = scmp.ne.s32.totalorder %s93, %s95
    %p99 = scmp.eq.s32.totalorder %s17, 0
    %p100 = por %p98, %p99
    %p101 = scmp.ne.s32.totalorder %s93, %s95
    %p102 = scmp.eq.s32.totalorder %s22, 1
    %p103 = por %p101, %p102
    %p104 = scmp.ne.s32.totalorder %s95, %s96
    %p105 = scmp.eq.s32.totalorder %s22, 0
    %p106 = por %p104, %p105
    %p107 = scmp.ne.s32.totalorder %s95, %s96
    %p108 = scmp.eq.s32.totalorder %s23, 1
    %p109 = por %p107, %p108
    %p111 = scmp.ne.s32.totalorder %s96, %s110
    %p112 = scmp.eq.s32.totalorder %s23, 0
    %p113 = por %p111, %p112
    %s115 = sadd.s32 %s114, 1
    %p118 = scmp.eq.s32.totalorder %s17, 1
    %p119 = scmp.ne.s32.totalorder %s114, %s116
    %p120 = scmp.eq.s32.totalorder %s17, 0
    %p121 = por %p119, %p120
    %p122 = scmp.ne.s32.totalorder %s114, %s116
    %p123 = scmp.eq.s32.totalorder %s22, 1
    %p124 = por %p122, %p123
    %p125 = scmp.ne.s32.totalorder %s116, %s117
    %p126 = scmp.eq.s32.totalorder %s22, 0
    %p127 = por %p125, %p126
    %p128 = scmp.ne.s32.totalorder %s116, %s117
    %p129 = scmp.eq.s32.totalorder %s23, 1
    %p130 = por %p128, %p129
    %p132 = scmp.ne.s32.totalorder %s117, %s131
    %p133 = scmp.eq.s32.totalorder %s23, 0
    %p134 = por %p132, %p133
    %s136 = sadd.s32 %s135, 1
    %p139 = scmp.eq.s32.totalorder %s17, 1
    %p140 = scmp.ne.s32.totalorder %s135, %s137
    %p141 = scmp.eq.s32.totalorder %s17, 0
    %p142 = por %p140, %p141
    %p143 = scmp.ne.s32.totalorder %s135, %s137
    %p144 = scmp.eq.s32.totalorder %s22, 1
    %p145 = por %p143, %p144
    %p146 = scmp.ne.s32.totalorder %s137, %s138
    %p147 = scmp.eq.s32.totalorder %s22, 0
    %p148 = por %p146, %p147
    %p149 = scmp.ne.s32.totalorder %s137, %s138
    %p150 = scmp.eq.s32.totalorder %s23, 1
    %p151 = por %p149, %p150
    %p153 = scmp.ne.s32.totalorder %s138, %s152
    %p154 = scmp.eq.s32.totalorder %s23, 0
    %p155 = por %p153, %p154
    %s157 = sadd.s32 %s156, 1
    %p160 = scmp.eq.s32.totalorder %s17, 1
    %p161 = scmp.ne.s32.totalorder %s156, %s158
    %p162 = scmp.eq.s32.totalorder %s17, 0
    %p163 = por %p161, %p162
    %p164 = scmp.ne.s32.totalorder %s156, %s158
    %p165 = scmp.eq.s32.totalorder %s22, 1
    %p166 = por %p164, %p165
    %p167 = scmp.ne.s32.totalorder %s158, %s159
    %p168 = scmp.eq.s32.totalorder %s22, 0
    %p169 = por %p167, %p168
    %p170 = scmp.ne.s32.totalorder %s158, %s159
    %p171 = scmp.eq.s32.totalorder %s23, 1
    %p172 = por %p170, %p171
    %p174 = scmp.ne.s32.totalorder %s159, %s173
    %p175 = scmp.eq.s32.totalorder %s23, 0
    %p176 = por %p174, %p175
    %s178 = sadd.s32 %s177, 1
    %p181 = scmp.eq.s32.totalorder %s17, 1
    %p182 = scmp.ne.s32.totalorder %s177, %s179
    %p183 = scmp.eq.s32.totalorder %s17, 0
    %p184 = por %p182, %p183
    %p185 = scmp.ne.s32.totalorder %s177, %s179
    %p186 = scmp.eq.s32.totalorder %s22, 1
    %p187 = por %p185, %p186
    %p188 = scmp.ne.s32.totalorder %s179, %s180
    %p189 = scmp.eq.s32.totalorder %s22, 0
    %p190 = por %p188, %p189
    %p191 = scmp.ne.s32.totalorder %s179, %s180
    %p192 = scmp.eq.s32.totalorder %s23, 1
    %p193 = por %p191, %p192
    %p195 = scmp.ne.s32.totalorder %s180, %s194
    %p196 = scmp.eq.s32.totalorder %s23, 0
    %p197 = por %p195, %p196
    %s199 = sadd.s32 %s198, 1
    %p202 = scmp.eq.s32.totalorder %s17, 1
    %p203 = scmp.ne.s32.totalorder %s198, %s200
    %p204 = scmp.eq.s32.totalorder %s17, 0
    %p205 = por %p203, %p204
    %p206 = scmp.ne.s32.totalorder %s198, %s200
    %p207 = scmp.eq.s32.totalorder %s22, 1
    %p208 = por %p206, %p207
    %p209 = scmp.ne.s32.totalorder %s200, %s201
    %p210 = scmp.eq.s32.totalorder %s22, 0
    %p211 = por %p209, %p210
    %p212 = scmp.ne.s32.totalorder %s200, %s201
    %p213 = scmp.eq.s32.totalorder %s23, 1
    %p214 = por %p212, %p213
    %p216 = scmp.ne.s32.totalorder %s201, %s215
    %p217 = scmp.eq.s32.totalorder %s23, 0
    %p218 = por %p216, %p217
    %s220 = sadd.s32 %s219, 1
    %p223 = scmp.eq.s32.totalorder %s17, 1
    %p224 = scmp.ne.s32.totalorder %s219, %s221
    %p225 = scmp.eq.s32.totalorder %s17, 0
    %p226 = por %p224, %p225
    %p227 = scmp.ne.s32.totalorder %s219, %s221
    %p228 = scmp.eq.s32.totalorder %s22, 1
    %p229 = por %p227, %p228
    %p230 = scmp.ne.s32.totalorder %s221, %s222
    %p231 = scmp.eq.s32.totalorder %s22, 0
    %p232 = por %p230, %p231
    %p233 = scmp.ne.s32.totalorder %s221, %s222
    %p234 = scmp.eq.s32.totalorder %s23, 1
    %p235 = por %p233, %p234
    %p237 = scmp.ne.s32.totalorder %s222, %s236
    %p238 = scmp.eq.s32.totalorder %s23, 0
    %p239 = por %p237, %p238
    %s240 = ssub.s32 %s24, %s36
    %s241 = ssub.s32 %s25, %s32
    %s242 = sor.u32 %s240, %s241
    %p243 = scmp.eq.s32.totalorder %s242, 0
    %s245 = sadd.s32 %s244, 1
    %s246 = scalar_select %p243, %s244, %s245
    %p249 = pneg %p243
    %p250 = scmp.eq.s32.totalorder %s17, 1
    %p251 = por %p249, %p250
    %p252 = scmp.ne.s32.totalorder %s244, %s247
    %p253 = scmp.eq.s32.totalorder %s17, 0
    %p254 = por %p252, %p253
    %p255 = scmp.ne.s32.totalorder %s244, %s247
    %p256 = scmp.eq.s32.totalorder %s22, 1
    %p257 = por %p255, %p256
    %p258 = scmp.ne.s32.totalorder %s247, %s248
    %p259 = scmp.eq.s32.totalorder %s22, 0
    %p260 = por %p258, %p259
    %p261 = scmp.ne.s32.totalorder %s247, %s248
    %p262 = scmp.eq.s32.totalorder %s23, 1
    %p263 = por %p261, %p262
    %p265 = scmp.ne.s32.totalorder %s248, %s264
    %p266 = scmp.eq.s32.totalorder %s23, 0
    %p267 = por %p265, %p266
    %p268 = scmp.le.s32.totalorder 1, %s17
    %p269 = scmp.lt.s32.totalorder %s17, 3
    %p270 = pnand %p268, %p269
    %p271 = pneg %p270
    // Predicated region
    $region9: #{tpu_custom_call.1} parent=5 // pred_check
      _
    $region10: #{tpu_custom_call.1} parent=5 // pred_check_branch
      %273 = sbr.rel (%p270) target = $region12
    $region11: #{tpu_custom_call.1} parent=5 // pred_region
      %s274 = ssub.s32 %s17, 1
      // Predicated region
      $region13: #{tpu_custom_call.1} parent=11 // pred_check
        %p275 = pneg %p106
      $region14: #{tpu_custom_call.1} parent=11 // pred_check_branch
        %277 = sbr.rel (%p275) target = $region16
      $region15: #{tpu_custom_call.1} parent=11 // pred_region
        _
      $region16: #{tpu_custom_call.1} parent=11 // pred_fallthru
        _
      // Predicated region
      $region17: #{tpu_custom_call.1} parent=11 // pred_check
        %p278 = pneg %p127
      $region18: #{tpu_custom_call.1} parent=11 // pred_check_branch
        %280 = sbr.rel (%p278) target = $region20
      $region19: #{tpu_custom_call.1} parent=11 // pred_region
        _
      $region20: #{tpu_custom_call.1} parent=11 // pred_fallthru
        _
      // Predicated region
      $region21: #{tpu_custom_call.1} parent=11 // pred_check
        %p281 = pneg %p148
      $region22: #{tpu_custom_call.1} parent=11 // pred_check_branch
        %283 = sbr.rel (%p281) target = $region24
      $region23: #{tpu_custom_call.1} parent=11 // pred_region
        _
      $region24: #{tpu_custom_call.1} parent=11 // pred_fallthru
        _
      // Predicated region
      $region25: #{tpu_custom_call.1} parent=11 // pred_check
        %p284 = pneg %p169
      $region26: #{tpu_custom_call.1} parent=11 // pred_check_branch
        %286 = sbr.rel (%p284) target = $region28
      $region27: #{tpu_custom_call.1} parent=11 // pred_region
        _
      $region28: #{tpu_custom_call.1} parent=11 // pred_fallthru
        _
      // Predicated region
      $region29: #{tpu_custom_call.1} parent=11 // pred_check
        %p287 = pneg %p190
      $region30: #{tpu_custom_call.1} parent=11 // pred_check_branch
        %289 = sbr.rel (%p287) target = $region32
      $region31: #{tpu_custom_call.1} parent=11 // pred_region
        _
      $region32: #{tpu_custom_call.1} parent=11 // pred_fallthru
        _
      // Predicated region
      $region33: #{tpu_custom_call.1} parent=11 // pred_check
        %p290 = pneg %p211
      $region34: #{tpu_custom_call.1} parent=11 // pred_check_branch
        %292 = sbr.rel (%p290) target = $region36
      $region35: #{tpu_custom_call.1} parent=11 // pred_region
        _
      $region36: #{tpu_custom_call.1} parent=11 // pred_fallthru
        _
      // Predicated region
      $region37: #{tpu_custom_call.1} parent=11 // pred_check
        %p293 = pneg %p232
      $region38: #{tpu_custom_call.1} parent=11 // pred_check_branch
        %295 = sbr.rel (%p293) target = $region40
      $region39: #{tpu_custom_call.1} parent=11 // pred_region
        _
      $region40: #{tpu_custom_call.1} parent=11 // pred_fallthru
        _
    $region12: #{tpu_custom_call.1} parent=5 // pred_fallthru
      _
    %p296 = scmp.lt.s32.totalorder %s17, 2
    // Predicated region
    $region41: #{tpu_custom_call.1} parent=5 // pred_check
      %p297 = pneg %p296
    $region42: #{tpu_custom_call.1} parent=5 // pred_check_branch
      %299 = sbr.rel (%p297) target = $region44
    $region43: #{tpu_custom_call.1} parent=5 // pred_region
      // Predicated region
      $region45: #{tpu_custom_call.1} parent=43 // pred_check
        %p300 = pneg %p51
      $region46: #{tpu_custom_call.1} parent=43 // pred_check_branch
        %302 = sbr.rel (%p300) target = $region48
      $region47: #{tpu_custom_call.1} parent=43 // pred_region
        %s303 = smul.u32 2, %s25
        %p304 = scmp.lt.s32.totalorder %s24, 1
        %s305 = scalar_select %p304, %s24, 1
        %p306 = scmp.lt.s32.totalorder %s303, 1
        %s307 = scalar_select %p306, %s303, 1
        %s308 = smul.addr %s305, 2
        %s309 = sadd.s32 %s307, %s308
        %s310 = smul.addr %s309, 4
        %s311 = scalar_lea.vmem %s0, %s310
        %s312 = smul.u32 2, %s25
      $region48: #{tpu_custom_call.1} parent=43 // pred_fallthru
        _
      // Predicated region
      $region49: #{tpu_custom_call.1} parent=43 // pred_check
        %p313 = pneg %p79
      $region50: #{tpu_custom_call.1} parent=43 // pred_check_branch
        %315 = sbr.rel (%p313) target = $region52
      $region51: #{tpu_custom_call.1} parent=43 // pred_region
        %s316 = smul.u32 2, %s25
        %p317 = scmp.lt.s32.totalorder %s24, 1
        %s318 = scalar_select %p317, %s24, 1
        %p319 = scmp.lt.s32.totalorder %s316, 1
        %s320 = scalar_select %p319, %s316, 1
        %s321 = smul.addr %s318, 2
        %s322 = sadd.s32 %s320, %s321
        %s323 = smul.addr %s322, 8
        %s324 = scalar_lea.vmem %s1, %s323
        %s325 = smul.u32 2, %s25
      $region52: #{tpu_custom_call.1} parent=43 // pred_fallthru
        _
    $region44: #{tpu_custom_call.1} parent=5 // pred_fallthru
      _
    %p326 = scmp.le.s32.totalorder 1, %s17
    %p327 = scmp.lt.s32.totalorder %s17, 3
    %p328 = pnand %p326, %p327
    %p329 = pneg %p328
    // Predicated region
    $region53: #{tpu_custom_call.1} parent=5 // pred_check
      _
    $region54: #{tpu_custom_call.1} parent=5 // pred_check_branch
      %331 = sbr.rel (%p328) target = $region56
    $region55: #{tpu_custom_call.1} parent=5 // pred_region
      %s332 = ssub.s32 %s17, 1
      %s333 = smul.u32 2, %s27
      %p334 = scmp.lt.s32.totalorder %s26, 1
      %s335 = scalar_select %p334, %s26, 1
      %p336 = scmp.lt.s32.totalorder %s333, 1
      %s337 = scalar_select %p336, %s333, 1
      %s338 = smul.addr %s335, 2
      %s339 = sadd.s32 %s337, %s338
      %s340 = smul.addr %s339, 4
      %s341 = scalar_lea.vmem %s0, %s340
      %p342 = pneg %p57
      %p343 = pneg %p54
      %s344 = smul.u32 2, %s27
      %p345 = scmp.lt.s32.totalorder %s26, 1
      %s346 = scalar_select %p345, %s26, 1
      %p347 = scmp.lt.s32.totalorder %s344, 1
      %s348 = scalar_select %p347, %s344, 1
      %s349 = smul.addr %s346, 2
      %s350 = sadd.s32 %s348, %s349
      %s351 = smul.addr %s350, 8
      %s352 = scalar_lea.vmem %s1, %s351
      %p353 = pneg %p85
      %p354 = pneg %p82
      %p355 = pneg %p106
      %p356 = pneg %p103
      %p357 = pneg %p127
      %p358 = pneg %p124
      %p359 = pneg %p148
      %p360 = pneg %p145
      %p361 = pneg %p169
      %p362 = pneg %p166
      %p363 = pneg %p190
      %p364 = pneg %p187
      %p365 = pneg %p211
      %p366 = pneg %p208
      %p367 = pneg %p232
      %p368 = pneg %p229
      %p369 = pneg %p260
      %p370 = pneg %p257
      %s371 = smul.u32 2, %s27
      %p372 = scmp.lt.s32.totalorder %s26, 1
      %s373 = scalar_select %p372, %s26, 1
      %p374 = scmp.lt.s32.totalorder %s371, 1
      %s375 = scalar_select %p374, %s371, 1
      %s376 = smul.addr %s373, 2
      %s377 = sadd.s32 %s375, %s376
      %s378 = smul.addr %s377, 8
      %s379 = scalar_lea.vmem %s9, %s378
      %s380 = smul.u32 2, %s27
      %p381 = scmp.lt.s32.totalorder %s26, 1
      %s382 = scalar_select %p381, %s26, 1
      %p383 = scmp.lt.s32.totalorder %s380, 1
      %s384 = scalar_select %p383, %s380, 1
      %s385 = smul.addr %s382, 2
      %s386 = sadd.s32 %s384, %s385
      %s387 = smul.addr %s386, 4
      %s388 = scalar_lea.vmem %s0, %s387
      %s389 = smul.u32 2, %s27
      %s390 = smul.u32 2, %s27
      %p391 = scmp.lt.s32.totalorder %s26, 1
      %s392 = scalar_select %p391, %s26, 1
      %p393 = scmp.lt.s32.totalorder %s390, 1
      %s394 = scalar_select %p393, %s390, 1
      %s395 = smul.addr %s392, 2
      %s396 = sadd.s32 %s394, %s395
      %s397 = smul.addr %s396, 8
      %s398 = scalar_lea.vmem %s1, %s397
      %s399 = smul.u32 2, %s27
      %s400 = smul.u32 2, %s27
      %p401 = scmp.lt.s32.totalorder %s26, 1
      %s402 = scalar_select %p401, %s26, 1
      %p403 = scmp.lt.s32.totalorder %s400, 1
      %s404 = scalar_select %p403, %s400, 1
      %s405 = smul.addr %s402, 2
      %s406 = sadd.s32 %s404, %s405
      %s407 = smul.addr %s406, 8
      %s408 = scalar_lea.vmem %s9, %s407
      %s409 = smul.u32 2, %s27
      %v410 = vld [vmem:[%s388] sm:$0xff]
      %v411 = vld [vmem:[%s3] sm:$0xff]
      %v412 = vld [vmem:[%s398] sm:$0x3f]
      %v413 = vld [vmem:[%s398 + $0x8] sm:$0x3f]
      %vm414 = vcmask 48128
      %v416 = vsel %vm414, %v411, 0
      %vm418 = vcmask 1045504
      %v420 = vsel %vm418, %v412, 0
      %v423 = vsel %vm418, %v413, 0
      %425 = vmatpush.msra.mxu0 0.0
      %426 = vmatpush.msra.mxu0 0.0
      %427 = vmatpush.msra.mxu0 0.0
      %428 = vmatpush.msra.mxu0 0.0
      %429 = vmatpush.msra.mxu0 0.0
      %430 = vmatpush.msra.mxu0 0.0
      %431 = vmatpush.msra.mxu0 0.0
      %432 = vmatpush.msra.mxu0 0.0
      %433 = vmatpush.msra.mxu0 0.0
      %434 = vmatpush.msra.mxu0 0.0
      %435 = vmatpush.msra.mxu0 0.0
      %436 = vmatpush.msra.mxu0 0.0
      %437 = vmatpush.msra.mxu0 0.0
      %438 = vmatpush.msra.mxu0 0.0
      %439 = vmatpush.msra.mxu0 0.0
      %440 = vmatpush.msra.mxu0 %v420
      %441 = vmatmul.f32.gmra.mxu0 %v416
      %v442 = vpop.f32.mrf.mxu0
      %v443 = vadd.f32 0.0, %v442
      %444 = vdwg.mxu0
      %445 = vmatpush.msra.mxu0 0.0
      %446 = vmatpush.msra.mxu0 0.0
      %447 = vmatpush.msra.mxu0 0.0
      %448 = vmatpush.msra.mxu0 0.0
      %449 = vmatpush.msra.mxu0 0.0
      %450 = vmatpush.msra.mxu0 0.0
      %451 = vmatpush.msra.mxu0 0.0
      %452 = vmatpush.msra.mxu0 0.0
      %453 = vmatpush.msra.mxu0 0.0
      %454 = vmatpush.msra.mxu0 0.0
      %455 = vmatpush.msra.mxu0 0.0
      %456 = vmatpush.msra.mxu0 0.0
      %457 = vmatpush.msra.mxu0 0.0
      %458 = vmatpush.msra.mxu0 0.0
      %459 = vmatpush.msra.mxu0 0.0
      %460 = vmatpush.msra.mxu0 %v423
      %461 = vmatmul.f32.gmra.mxu0 %v416
      %v462 = vpop.f32.mrf.mxu0
      %v463 = vadd.f32 0.0, %v462
      %464 = vdwg.mxu0
      %v465 = vld [vmem:[%s2] sm:$0xff]
      %v466 = vld [vmem:[%s4] sm:$0xff]
      %v467 = vld [vmem:[%s5] sm:$0xff]
      %v468 = vld [vmem:[#allocation2] sm:$0x1]
      %v469 = vld [vmem:[%s7] sm:$0x3f]
      %v470 = vld [vmem:[%s8] sm:$0x3f]
      %472 = vst [vmem:[#allocation1] ss:$2 sm:$0xff] %v410
      %v473 = vld.sshfl [vmem:[#allocation1] sm:$0xff pattern:$0x75316420]
      %v474 = vld.sshfl [vmem:[#allocation1 + $0x8] sm:$0xff pattern:$0x75316420]
      %vm475 = vcmask 31744
      %v477 = vsel %vm475, %v465, 0
      %vm479 = vcmask 1043456
      %v480 = vsel %vm479, %v473, 0
      %v482 = vsel %vm479, %v474, 0
      %484 = vmatpush.msra.mxu0 0.0
      %485 = vmatpush.msra.mxu0 0.0
      %486 = vmatpush.msra.mxu0 0.0
      %487 = vmatpush.msra.mxu0 0.0
      %488 = vmatpush.msra.mxu0 0.0
      %489 = vmatpush.msra.mxu0 0.0
      %490 = vmatpush.msra.mxu0 0.0
      %491 = vmatpush.msra.mxu0 0.0
      %492 = vmatpush.msra.mxu0 0.0
      %493 = vmatpush.msra.mxu0 0.0
      %494 = vmatpush.msra.mxu0 0.0
      %495 = vmatpush.msra.mxu0 0.0
      %496 = vmatpush.msra.mxu0 0.0
      %497 = vmatpush.msra.mxu0 0.0
      %498 = vmatpush.msra.mxu0 0.0
      %499 = vmatpush.msra.mxu0 %v480
      %500 = vmatmul.f32.gmra.mxu0 %v477
      %v501 = vpop.f32.mrf.mxu0
      %v502 = vadd.f32 %v443, %v501
      %503 = vdwg.mxu0
      %504 = vmatpush.msra.mxu0 0.0
      %505 = vmatpush.msra.mxu0 0.0
      %506 = vmatpush.msra.mxu0 0.0
      %507 = vmatpush.msra.mxu0 0.0
      %508 = vmatpush.msra.mxu0 0.0
      %509 = vmatpush.msra.mxu0 0.0
      %510 = vmatpush.msra.mxu0 0.0
      %511 = vmatpush.msra.mxu0 0.0
      %512 = vmatpush.msra.mxu0 0.0
      %513 = vmatpush.msra.mxu0 0.0
      %514 = vmatpush.msra.mxu0 0.0
      %515 = vmatpush.msra.mxu0 0.0
      %516 = vmatpush.msra.mxu0 0.0
      %517 = vmatpush.msra.mxu0 0.0
      %518 = vmatpush.msra.mxu0 0.0
      %519 = vmatpush.msra.mxu0 %v482
      %520 = vmatmul.f32.gmra.mxu0 %v477
      %v521 = vpop.f32.mrf.mxu0
      %v522 = vadd.f32 %v463, %v521
      %523 = vdwg.mxu0
      %525 = vset.pattern.permute.xlu0 0
      %526 = vperm.xlu0 %525, %v466
      %v527 = vpop.permute.xlu0 %526
      %v529 = vadd.f32 %v502, %v527
      %v530 = vadd.f32 %v522, %v527
      %v531 = vmax.f32 %v529, 0.0
      %v532 = vmax.f32 %v530, 0.0
      %534 = vset.pattern.permute.xlu0 0
      %535 = vperm.xlu0 %534, %v467
      %v536 = vpop.permute.xlu0 %535
      %v538 = vmul.f32 %v531, %v536
      %v539 = vmul.f32 %v532, %v536
      %v540 = vrot.slane %v538, 4
      %v541 = vadd.f32 %v538, %v540
      %v542 = vrot.slane %v541, 2
      %v543 = vadd.f32 %v541, %v542
      %v544 = vrot.slane %v543, 1
      %v545 = vadd.f32 %v543, %v544
      %v546 = vrot.slane %v539, 4
      %v547 = vadd.f32 %v539, %v546
      %v548 = vrot.slane %v547, 2
      %v549 = vadd.f32 %v547, %v548
      %v550 = vrot.slane %v549, 1
      %v551 = vadd.f32 %v549, %v550
      %553 = vset.pattern.permute.xlu0 0
      %554 = vperm.xlu0 %553, %v468
      %v555 = vpop.permute.xlu0 %554
      %v557 = vperm.slane %v555, 0
      %v558 = vadd.f32 %v545, %v557
      %v559 = vadd.f32 %v551, %v557
      %v560 = vxor.u32 %v558, 2147483648
      %v561 = vxor.u32 %v559, 2147483648
      %v562 = vmul.f32 %v560, 1.442695
      %v563 = vpow.pop %v562
      %v564 = vmul.f32 %v561, 1.442695
      %v565 = vpow.pop %v564
      %v566 = vadd.f32 %v563, 1.0
      %v567 = vadd.f32 %v565, 1.0
      %v568 = vrcp.pop %v566
      %v569 = vmul.f32 %v566, %v568
      %v570 = vsub.f32 1.0, %v569
      %v571 = vmul.f32 %v568, %v570
      %v572 = vadd.f32 %v568, %v571
      %vm573 = vweird.f32 %v566
      %vm574 = vweird.f32 %v568
      %vm575 = vmor %vm573, %vm574
      %v576 = vsel %vm575, %v568, %v572
      %v577 = vand.u32 2147483647, %v566
      %vm578 = vcmp.eq.f32.partialorder %v577, 8.507059e+37
      %v579 = vand.u32 %v566, 2147483648
      %v580 = vor.u32 1.1754944e-38, %v579
      %v581 = vsel %vm578, %v580, %v576
      %v582 = vmul.f32 1.0, %v581
      %v583 = vrcp.pop %v567
      %v584 = vmul.f32 %v567, %v583
      %v585 = vsub.f32 1.0, %v584
      %v586 = vmul.f32 %v583, %v585
      %v587 = vadd.f32 %v583, %v586
      %vm588 = vweird.f32 %v567
      %vm589 = vweird.f32 %v583
      %vm590 = vmor %vm588, %vm589
      %v591 = vsel %vm590, %v583, %v587
      %v592 = vand.u32 2147483647, %v567
      %vm593 = vcmp.eq.f32.partialorder %v592, 8.507059e+37
      %v594 = vand.u32 %v567, 2147483648
      %v595 = vor.u32 1.1754944e-38, %v594
      %v596 = vsel %vm593, %v595, %v591
      %v597 = vmul.f32 1.0, %v596
      %v600 = vrot.slane %v597, 4
      %v601 = vsel %vm479, %v582, %v600
      %v603 = vmul.f32 %v410, %v601
      %605 = vset.pattern.permute.xlu0 0
      %606 = vperm.xlu0 %605, %v470
      %v607 = vpop.permute.xlu0 %606
      %610 = vst [vmem:[#allocation1] ss:$2 sm:$0xff] %v603
      %v611 = vld.sshfl [vmem:[#allocation1] sm:$0xff pattern:$0x75316420]
      %v612 = vld.sshfl [vmem:[#allocation1 + $0x8] sm:$0xff pattern:$0x75316420]
      %v614 = vsel %vm475, %v469, 0
      %v616 = vsel %vm479, %v611, 0
      %v618 = vsel %vm479, %v612, 0
      %620 = vmatpush.msra.mxu0 0.0
      %621 = vmatpush.msra.mxu0 0.0
      %622 = vmatpush.msra.mxu0 0.0
      %623 = vmatpush.msra.mxu0 0.0
      %624 = vmatpush.msra.mxu0 0.0
      %625 = vmatpush.msra.mxu0 0.0
      %626 = vmatpush.msra.mxu0 0.0
      %627 = vmatpush.msra.mxu0 0.0
      %628 = vmatpush.msra.mxu0 0.0
      %629 = vmatpush.msra.mxu0 0.0
      %630 = vmatpush.msra.mxu0 0.0
      %631 = vmatpush.msra.mxu0 0.0
      %632 = vmatpush.msra.mxu0 0.0
      %633 = vmatpush.msra.mxu0 0.0
      %634 = vmatpush.msra.mxu0 0.0
      %635 = vmatpush.msra.mxu0 %v616
      %636 = vmatmul.f32.gmra.mxu0 %v614
      %v637 = vpop.f32.mrf.mxu0
      %v638 = vadd.f32 %v607, %v637
      %639 = vdwg.mxu0
      %640 = vmatpush.msra.mxu0 0.0
      %641 = vmatpush.msra.mxu0 0.0
      %642 = vmatpush.msra.mxu0 0.0
      %643 = vmatpush.msra.mxu0 0.0
      %644 = vmatpush.msra.mxu0 0.0
      %645 = vmatpush.msra.mxu0 0.0
      %646 = vmatpush.msra.mxu0 0.0
      %647 = vmatpush.msra.mxu0 0.0
      %648 = vmatpush.msra.mxu0 0.0
      %649 = vmatpush.msra.mxu0 0.0
      %650 = vmatpush.msra.mxu0 0.0
      %651 = vmatpush.msra.mxu0 0.0
      %652 = vmatpush.msra.mxu0 0.0
      %653 = vmatpush.msra.mxu0 0.0
      %654 = vmatpush.msra.mxu0 0.0
      %655 = vmatpush.msra.mxu0 %v618
      %656 = vmatmul.f32.gmra.mxu0 %v614
      %v657 = vpop.f32.mrf.mxu0
      %v658 = vadd.f32 %v607, %v657
      %659 = vdwg.mxu0
      %660 = vst [vmem:[%s408] sm:$0x3f] %v638
      %661 = vst [vmem:[%s408 + $0x8] sm:$0x3f] %v658
      %s662 = smul.u32 2, %s27
      %p663 = scmp.lt.s32.totalorder %s26, 1
      %s664 = scalar_select %p663, %s26, 1
      %p665 = scmp.lt.s32.totalorder %s662, 1
      %s666 = scalar_select %p665, %s662, 1
      %s667 = smul.addr %s664, 2
      %s668 = sadd.s32 %s666, %s667
      %s669 = smul.addr %s668, 8
      %s670 = scalar_lea.vmem %s9, %s669
      // Predicated region
      $region57: #{tpu_custom_call.1} parent=55 // pred_check
        %p671 = pneg %p257
      $region58: #{tpu_custom_call.1} parent=55 // pred_check_branch
        %673 = sbr.rel (%p671) target = $region60
      $region59: #{tpu_custom_call.1} parent=55 // pred_region
        %s674 = smul.u32 2, %s27
      $region60: #{tpu_custom_call.1} parent=55 // pred_fallthru
        _
    $region56: #{tpu_custom_call.1} parent=5 // pred_fallthru
      _
    %p675 = scmp.le.s32.totalorder 2, %s17
    // Predicated region
    $region61: #{tpu_custom_call.1} parent=5 // pred_check
      %p676 = pneg %p675
    $region62: #{tpu_custom_call.1} parent=5 // pred_check_branch
      %678 = sbr.rel (%p676) target = $region64
    $region63: #{tpu_custom_call.1} parent=5 // pred_region
      %s679 = ssub.s32 %s17, 2
      // Predicated region
      $region65: #{tpu_custom_call.1} parent=63 // pred_check
        %p680 = pneg %p263
      $region66: #{tpu_custom_call.1} parent=63 // pred_check_branch
        %682 = sbr.rel (%p680) target = $region68
      $region67: #{tpu_custom_call.1} parent=63 // pred_region
        %s683 = smul.u32 2, %s29
        %p684 = scmp.lt.s32.totalorder %s28, 1
        %s685 = scalar_select %p684, %s28, 1
        %p686 = scmp.lt.s32.totalorder %s683, 1
        %s687 = scalar_select %p686, %s683, 1
        %s688 = smul.addr %s685, 2
        %s689 = sadd.s32 %s687, %s688
        %s690 = smul.addr %s689, 8
        %s691 = scalar_lea.vmem %s9, %s690
      $region68: #{tpu_custom_call.1} parent=63 // pred_fallthru
        _
    $region64: #{tpu_custom_call.1} parent=5 // pred_fallthru
      _
  $region6: #{tpu_custom_call.1} parent=0 // loop_footer
    %s21 = sadd.s32 1, %s17
  $region7: #{tpu_custom_call.1} parent=0 // loop_footer_branch
    %16 = sbr.rel target = $region3
  $region8: #{tpu_custom_call.1} parent=0 // loop_exit
    _

// kernel: tpu_custom_call.1
$region0: #{tpu_custom_call.1}
  #allocation0 [shape = 'u32[]', space=smem, size = 0x4, offset = 0x4, fixed_abs, tag = 'smem constant byte address 0x4 - core index']
  #allocation1 [shape = 'u32[72,128]{1,0:T(1,128)}', space=vmem, size = 0x9000, scoped, tag = 'internal scratch']
  #allocation2 [shape = 'f32[1,1]{1,0:T(1,128)S(1)}', space=vmem, size = 0x200, scoped, tag = 'scoped memory for tpu_custom_call.1']
  %s0 = inlined_call_operand.vmem [shape: f32[2,4,256], index: 0, kind: input, shape index: {}]
  %s1 = inlined_call_operand.vmem [shape: f32[2,6,256], index: 1, kind: input, shape index: {}]
  %s2 = inlined_call_operand.vmem [shape: f32[8,4], index: 2, kind: input, shape index: {}]
  %s3 = inlined_call_operand.vmem [shape: f32[8,6], index: 3, kind: input, shape index: {}]
  %s4 = inlined_call_operand.vmem [shape: f32[8,1], index: 4, kind: input, shape index: {}]
  %s5 = inlined_call_operand.vmem [shape: f32[8,1], index: 5, kind: input, shape index: {}]
  %s6 = inlined_call_operand.<no memory space> [shape: f32[1,1], index: 6, kind: input, shape index: {}]
  %s7 = inlined_call_operand.vmem [shape: f32[6,4], index: 7, kind: input, shape index: {}]
  %s8 = inlined_call_operand.vmem [shape: f32[6,1], index: 8, kind: input, shape index: {}]
  %s9 = inlined_call_operand.vmem [shape: f32[2,6,256], index: 9, kind: output, shape index: {}]
  %s10 = sld [smem:[#allocation0]]
  $region69: #{tpu_custom_call.1} parent=0
    _
  %s12 = ssub.s32 1, %s10
  %s13 = scalar_select 0, %s12, %s10
  %v14 = vstv %s6
  %15 = vst [vmem:[#allocation2] sm:$0x1] %v14
  loop: start=0, step=1, limit=4
  $region2: #{tpu_custom_call.1} parent=0 // loop_pre_header
    _
  $region3: #{tpu_custom_call.1} parent=0 // loop_header
    %s17 = sphi 0, %s21
    %p18 = scmp.ge.s32.totalorder %s17, 4
    %s24 = sphi 0, %s36
    %s25 = sphi 0, %s32
    %s26 = sphi 0, %s24
    %s27 = sphi 0, %s25
    %s28 = sphi 0, %s26
    %s29 = sphi 0, %s27
    %s41 = sphi 0, %s43
    %s44 = sphi 0, %s41
    %s45 = sphi 0, %s44
    %s61 = sphi 0, %s45
    %s69 = sphi 0, %s71
    %s72 = sphi 0, %s69
    %s73 = sphi 0, %s72
    %s89 = sphi 0, %s73
    %s93 = sphi 0, %s93
    %s95 = sphi 0, %s93
    %s96 = sphi 0, %s95
    %s110 = sphi 0, %s96
    %s114 = sphi 0, %s114
    %s116 = sphi 0, %s114
    %s117 = sphi 0, %s116
    %s131 = sphi 0, %s117
    %s135 = sphi 0, %s135
    %s137 = sphi 0, %s135
    %s138 = sphi 0, %s137
    %s152 = sphi 0, %s138
    %s156 = sphi 0, %s156
    %s158 = sphi 0, %s156
    %s159 = sphi 0, %s158
    %s173 = sphi 0, %s159
    %s177 = sphi 0, %s177
    %s179 = sphi 0, %s177
    %s180 = sphi 0, %s179
    %s194 = sphi 0, %s180
    %s198 = sphi 0, %s198
    %s200 = sphi 0, %s198
    %s201 = sphi 0, %s200
    %s215 = sphi 0, %s201
    %s219 = sphi 0, %s219
    %s221 = sphi 0, %s219
    %s222 = sphi 0, %s221
    %s236 = sphi 0, %s222
    %s244 = sphi 0, %s246
    %s247 = sphi 0, %s244
    %s248 = sphi 0, %s247
    %s264 = sphi 0, %s248
  $region4: #{tpu_custom_call.1} parent=0 // loop_header_branch
    %20 = sbr.rel (%p18) target = $region8
  $region5: #{tpu_custom_call.1} parent=0 // loop_body
    %s22 = ssub.s32 %s17, 1
    %s23 = ssub.s32 %s17, 2
    %s30 = sadd.s32 1, %s25
    %p31 = scmp.ge.s32.totalorder %s30, 1
    %s32 = scalar_select %p31, 0, %s30
    %s33 = sadd.s32 1, %s24
    %s34 = scalar_select %p31, %s33, %s24
    %p35 = scmp.ge.s32.totalorder %s34, 2
    %s36 = scalar_select %p35, 0, %s34
    %s37 = ssub.s32 %s24, %s36
    %s38 = ssub.s32 %s25, %s32
    %s39 = sor.u32 %s37, %s38
    %p40 = scmp.eq.s32.totalorder %s39, 0
    %s42 = sadd.s32 %s41, 1
    %s43 = scalar_select %p40, %s41, %s42
    %p46 = pneg %p40
    %p47 = scmp.eq.s32.totalorder %s17, 1
    %p48 = por %p46, %p47
    %p49 = scmp.ne.s32.totalorder %s41, %s44
    %p50 = scmp.eq.s32.totalorder %s17, 0
    %p51 = por %p49, %p50
    %p52 = scmp.ne.s32.totalorder %s41, %s44
    %p53 = scmp.eq.s32.totalorder %s22, 1
    %p54 = por %p52, %p53
    %p55 = scmp.ne.s32.totalorder %s44, %s45
    %p56 = scmp.eq.s32.totalorder %s22, 0
    %p57 = por %p55, %p56
    %p58 = scmp.ne.s32.totalorder %s44, %s45
    %p59 = scmp.eq.s32.totalorder %s23, 1
    %p60 = por %p58, %p59
    %p62 = scmp.ne.s32.totalorder %s45, %s61
    %p63 = scmp.eq.s32.totalorder %s23, 0
    %p64 = por %p62, %p63
    %s65 = ssub.s32 %s24, %s36
    %s66 = ssub.s32 %s25, %s32
    %s67 = sor.u32 %s65, %s66
    %p68 = scmp.eq.s32.totalorder %s67, 0
    %s70 = sadd.s32 %s69, 1
    %s71 = scalar_select %p68, %s69, %s70
    %p74 = pneg %p68
    %p75 = scmp.eq.s32.totalorder %s17, 1
    %p76 = por %p74, %p75
    %p77 = scmp.ne.s32.totalorder %s69, %s72
    %p78 = scmp.eq.s32.totalorder %s17, 0
    %p79 = por %p77, %p78
    %p80 = scmp.ne.s32.totalorder %s69, %s72
    %p81 = scmp.eq.s32.totalorder %s22, 1
    %p82 = por %p80, %p81
    %p83 = scmp.ne.s32.totalorder %s72, %s73
    %p84 = scmp.eq.s32.totalorder %s22, 0
    %p85 = por %p83, %p84
    %p86 = scmp.ne.s32.totalorder %s72, %s73
    %p87 = scmp.eq.s32.totalorder %s23, 1
    %p88 = por %p86, %p87
    %p90 = scmp.ne.s32.totalorder %s73, %s89
    %p91 = scmp.eq.s32.totalorder %s23, 0
    %p92 = por %p90, %p91
    %s94 = sadd.s32 %s93, 1
    %p97 = scmp.eq.s32.totalorder %s17, 1
    %p98 = scmp.ne.s32.totalorder %s93, %s95
    %p99 = scmp.eq.s32.totalorder %s17, 0
    %p100 = por %p98, %p99
    %p101 = scmp.ne.s32.totalorder %s93, %s95
    %p102 = scmp.eq.s32.totalorder %s22, 1
    %p103 = por %p101, %p102
    %p104 = scmp.ne.s32.totalorder %s95, %s96
    %p105 = scmp.eq.s32.totalorder %s22, 0
    %p106 = por %p104, %p105
    %p107 = scmp.ne.s32.totalorder %s95, %s96
    %p108 = scmp.eq.s32.totalorder %s23, 1
    %p109 = por %p107, %p108
    %p111 = scmp.ne.s32.totalorder %s96, %s110
    %p112 = scmp.eq.s32.totalorder %s23, 0
    %p113 = por %p111, %p112
    %s115 = sadd.s32 %s114, 1
    %p118 = scmp.eq.s32.totalorder %s17, 1
    %p119 = scmp.ne.s32.totalorder %s114, %s116
    %p120 = scmp.eq.s32.totalorder %s17, 0
    %p121 = por %p119, %p120
    %p122 = scmp.ne.s32.totalorder %s114, %s116
    %p123 = scmp.eq.s32.totalorder %s22, 1
    %p124 = por %p122, %p123
    %p125 = scmp.ne.s32.totalorder %s116, %s117
    %p126 = scmp.eq.s32.totalorder %s22, 0
    %p127 = por %p125, %p126
    %p128 = scmp.ne.s32.totalorder %s116, %s117
    %p129 = scmp.eq.s32.totalorder %s23, 1
    %p130 = por %p128, %p129
    %p132 = scmp.ne.s32.totalorder %s117, %s131
    %p133 = scmp.eq.s32.totalorder %s23, 0
    %p134 = por %p132, %p133
    %s136 = sadd.s32 %s135, 1
    %p139 = scmp.eq.s32.totalorder %s17, 1
    %p140 = scmp.ne.s32.totalorder %s135, %s137
    %p141 = scmp.eq.s32.totalorder %s17, 0
    %p142 = por %p140, %p141
    %p143 = scmp.ne.s32.totalorder %s135, %s137
    %p144 = scmp.eq.s32.totalorder %s22, 1
    %p145 = por %p143, %p144
    %p146 = scmp.ne.s32.totalorder %s137, %s138
    %p147 = scmp.eq.s32.totalorder %s22, 0
    %p148 = por %p146, %p147
    %p149 = scmp.ne.s32.totalorder %s137, %s138
    %p150 = scmp.eq.s32.totalorder %s23, 1
    %p151 = por %p149, %p150
    %p153 = scmp.ne.s32.totalorder %s138, %s152
    %p154 = scmp.eq.s32.totalorder %s23, 0
    %p155 = por %p153, %p154
    %s157 = sadd.s32 %s156, 1
    %p160 = scmp.eq.s32.totalorder %s17, 1
    %p161 = scmp.ne.s32.totalorder %s156, %s158
    %p162 = scmp.eq.s32.totalorder %s17, 0
    %p163 = por %p161, %p162
    %p164 = scmp.ne.s32.totalorder %s156, %s158
    %p165 = scmp.eq.s32.totalorder %s22, 1
    %p166 = por %p164, %p165
    %p167 = scmp.ne.s32.totalorder %s158, %s159
    %p168 = scmp.eq.s32.totalorder %s22, 0
    %p169 = por %p167, %p168
    %p170 = scmp.ne.s32.totalorder %s158, %s159
    %p171 = scmp.eq.s32.totalorder %s23, 1
    %p172 = por %p170, %p171
    %p174 = scmp.ne.s32.totalorder %s159, %s173
    %p175 = scmp.eq.s32.totalorder %s23, 0
    %p176 = por %p174, %p175
    %s178 = sadd.s32 %s177, 1
    %p181 = scmp.eq.s32.totalorder %s17, 1
    %p182 = scmp.ne.s32.totalorder %s177, %s179
    %p183 = scmp.eq.s32.totalorder %s17, 0
    %p184 = por %p182, %p183
    %p185 = scmp.ne.s32.totalorder %s177, %s179
    %p186 = scmp.eq.s32.totalorder %s22, 1
    %p187 = por %p185, %p186
    %p188 = scmp.ne.s32.totalorder %s179, %s180
    %p189 = scmp.eq.s32.totalorder %s22, 0
    %p190 = por %p188, %p189
    %p191 = scmp.ne.s32.totalorder %s179, %s180
    %p192 = scmp.eq.s32.totalorder %s23, 1
    %p193 = por %p191, %p192
    %p195 = scmp.ne.s32.totalorder %s180, %s194
    %p196 = scmp.eq.s32.totalorder %s23, 0
    %p197 = por %p195, %p196
    %s199 = sadd.s32 %s198, 1
    %p202 = scmp.eq.s32.totalorder %s17, 1
    %p203 = scmp.ne.s32.totalorder %s198, %s200
    %p204 = scmp.eq.s32.totalorder %s17, 0
    %p205 = por %p203, %p204
    %p206 = scmp.ne.s32.totalorder %s198, %s200
    %p207 = scmp.eq.s32.totalorder %s22, 1
    %p208 = por %p206, %p207
    %p209 = scmp.ne.s32.totalorder %s200, %s201
    %p210 = scmp.eq.s32.totalorder %s22, 0
    %p211 = por %p209, %p210
    %p212 = scmp.ne.s32.totalorder %s200, %s201
    %p213 = scmp.eq.s32.totalorder %s23, 1
    %p214 = por %p212, %p213
    %p216 = scmp.ne.s32.totalorder %s201, %s215
    %p217 = scmp.eq.s32.totalorder %s23, 0
    %p218 = por %p216, %p217
    %s220 = sadd.s32 %s219, 1
    %p223 = scmp.eq.s32.totalorder %s17, 1
    %p224 = scmp.ne.s32.totalorder %s219, %s221
    %p225 = scmp.eq.s32.totalorder %s17, 0
    %p226 = por %p224, %p225
    %p227 = scmp.ne.s32.totalorder %s219, %s221
    %p228 = scmp.eq.s32.totalorder %s22, 1
    %p229 = por %p227, %p228
    %p230 = scmp.ne.s32.totalorder %s221, %s222
    %p231 = scmp.eq.s32.totalorder %s22, 0
    %p232 = por %p230, %p231
    %p233 = scmp.ne.s32.totalorder %s221, %s222
    %p234 = scmp.eq.s32.totalorder %s23, 1
    %p235 = por %p233, %p234
    %p237 = scmp.ne.s32.totalorder %s222, %s236
    %p238 = scmp.eq.s32.totalorder %s23, 0
    %p239 = por %p237, %p238
    %s240 = ssub.s32 %s24, %s36
    %s241 = ssub.s32 %s25, %s32
    %s242 = sor.u32 %s240, %s241
    %p243 = scmp.eq.s32.totalorder %s242, 0
    %s245 = sadd.s32 %s244, 1
    %s246 = scalar_select %p243, %s244, %s245
    %p249 = pneg %p243
    %p250 = scmp.eq.s32.totalorder %s17, 1
    %p251 = por %p249, %p250
    %p252 = scmp.ne.s32.totalorder %s244, %s247
    %p253 = scmp.eq.s32.totalorder %s17, 0
    %p254 = por %p252, %p253
    %p255 = scmp.ne.s32.totalorder %s244, %s247
    %p256 = scmp.eq.s32.totalorder %s22, 1
    %p257 = por %p255, %p256
    %p258 = scmp.ne.s32.totalorder %s247, %s248
    %p259 = scmp.eq.s32.totalorder %s22, 0
    %p260 = por %p258, %p259
    %p261 = scmp.ne.s32.totalorder %s247, %s248
    %p262 = scmp.eq.s32.totalorder %s23, 1
    %p263 = por %p261, %p262
    %p265 = scmp.ne.s32.totalorder %s248, %s264
    %p266 = scmp.eq.s32.totalorder %s23, 0
    %p267 = por %p265, %p266
    %p268 = scmp.le.s32.totalorder 1, %s17
    %p269 = scmp.lt.s32.totalorder %s17, 3
    %p270 = pnand %p268, %p269
    %p271 = pneg %p270
    // Predicated region
    $region9: #{tpu_custom_call.1} parent=5 // pred_check
      _
    $region10: #{tpu_custom_call.1} parent=5 // pred_check_branch
      %273 = sbr.rel (%p270) target = $region12
    $region11: #{tpu_custom_call.1} parent=5 // pred_region
      %s274 = ssub.s32 %s17, 1
      // Predicated region
      $region13: #{tpu_custom_call.1} parent=11 // pred_check
        %p275 = pneg %p106
      $region14: #{tpu_custom_call.1} parent=11 // pred_check_branch
        %277 = sbr.rel (%p275) target = $region16
      $region15: #{tpu_custom_call.1} parent=11 // pred_region
        _
      $region16: #{tpu_custom_call.1} parent=11 // pred_fallthru
        _
      // Predicated region
      $region17: #{tpu_custom_call.1} parent=11 // pred_check
        %p278 = pneg %p127
      $region18: #{tpu_custom_call.1} parent=11 // pred_check_branch
        %280 = sbr.rel (%p278) target = $region20
      $region19: #{tpu_custom_call.1} parent=11 // pred_region
        _
      $region20: #{tpu_custom_call.1} parent=11 // pred_fallthru
        _
      // Predicated region
      $region21: #{tpu_custom_call.1} parent=11 // pred_check
        %p281 = pneg %p148
      $region22: #{tpu_custom_call.1} parent=11 // pred_check_branch
        %283 = sbr.rel (%p281) target = $region24
      $region23: #{tpu_custom_call.1} parent=11 // pred_region
        _
      $region24: #{tpu_custom_call.1} parent=11 // pred_fallthru
        _
      // Predicated region
      $region25: #{tpu_custom_call.1} parent=11 // pred_check
        %p284 = pneg %p169
      $region26: #{tpu_custom_call.1} parent=11 // pred_check_branch
        %286 = sbr.rel (%p284) target = $region28
      $region27: #{tpu_custom_call.1} parent=11 // pred_region
        _
      $region28: #{tpu_custom_call.1} parent=11 // pred_fallthru
        _
      // Predicated region
      $region29: #{tpu_custom_call.1} parent=11 // pred_check
        %p287 = pneg %p190
      $region30: #{tpu_custom_call.1} parent=11 // pred_check_branch
        %289 = sbr.rel (%p287) target = $region32
      $region31: #{tpu_custom_call.1} parent=11 // pred_region
        _
      $region32: #{tpu_custom_call.1} parent=11 // pred_fallthru
        _
      // Predicated region
      $region33: #{tpu_custom_call.1} parent=11 // pred_check
        %p290 = pneg %p211
      $region34: #{tpu_custom_call.1} parent=11 // pred_check_branch
        %292 = sbr.rel (%p290) target = $region36
      $region35: #{tpu_custom_call.1} parent=11 // pred_region
        _
      $region36: #{tpu_custom_call.1} parent=11 // pred_fallthru
        _
      // Predicated region
      $region37: #{tpu_custom_call.1} parent=11 // pred_check
        %p293 = pneg %p232
      $region38: #{tpu_custom_call.1} parent=11 // pred_check_branch
        %295 = sbr.rel (%p293) target = $region40
      $region39: #{tpu_custom_call.1} parent=11 // pred_region
        _
      $region40: #{tpu_custom_call.1} parent=11 // pred_fallthru
        _
    $region12: #{tpu_custom_call.1} parent=5 // pred_fallthru
      _
    %p296 = scmp.lt.s32.totalorder %s17, 2
    // Predicated region
    $region41: #{tpu_custom_call.1} parent=5 // pred_check
      %p297 = pneg %p296
    $region42: #{tpu_custom_call.1} parent=5 // pred_check_branch
      %299 = sbr.rel (%p297) target = $region44
    $region43: #{tpu_custom_call.1} parent=5 // pred_region
      // Predicated region
      $region45: #{tpu_custom_call.1} parent=43 // pred_check
        %p300 = pneg %p51
      $region46: #{tpu_custom_call.1} parent=43 // pred_check_branch
        %302 = sbr.rel (%p300) target = $region48
      $region47: #{tpu_custom_call.1} parent=43 // pred_region
        %s303 = smul.u32 2, %s25
        %p304 = scmp.lt.s32.totalorder %s24, 1
        %s305 = scalar_select %p304, %s24, 1
        %p306 = scmp.lt.s32.totalorder %s303, 1
        %s307 = scalar_select %p306, %s303, 1
        %s308 = smul.addr %s305, 2
        %s309 = sadd.s32 %s307, %s308
        %s310 = smul.addr %s309, 4
        %s311 = scalar_lea.vmem %s0, %s310
        %s312 = smul.u32 2, %s25
      $region48: #{tpu_custom_call.1} parent=43 // pred_fallthru
        _
      // Predicated region
      $region49: #{tpu_custom_call.1} parent=43 // pred_check
        %p313 = pneg %p79
      $region50: #{tpu_custom_call.1} parent=43 // pred_check_branch
        %315 = sbr.rel (%p313) target = $region52
      $region51: #{tpu_custom_call.1} parent=43 // pred_region
        %s316 = smul.u32 2, %s25
        %p317 = scmp.lt.s32.totalorder %s24, 1
        %s318 = scalar_select %p317, %s24, 1
        %p319 = scmp.lt.s32.totalorder %s316, 1
        %s320 = scalar_select %p319, %s316, 1
        %s321 = smul.addr %s318, 2
        %s322 = sadd.s32 %s320, %s321
        %s323 = smul.addr %s322, 8
        %s324 = scalar_lea.vmem %s1, %s323
        %s325 = smul.u32 2, %s25
      $region52: #{tpu_custom_call.1} parent=43 // pred_fallthru
        _
    $region44: #{tpu_custom_call.1} parent=5 // pred_fallthru
      _
    %p326 = scmp.le.s32.totalorder 1, %s17
    %p327 = scmp.lt.s32.totalorder %s17, 3
    %p328 = pnand %p326, %p327
    %p329 = pneg %p328
    // Predicated region
    $region53: #{tpu_custom_call.1} parent=5 // pred_check
      _
    $region54: #{tpu_custom_call.1} parent=5 // pred_check_branch
      %331 = sbr.rel (%p328) target = $region56
    $region55: #{tpu_custom_call.1} parent=5 // pred_region
      %s332 = ssub.s32 %s17, 1
      %s333 = smul.u32 2, %s27
      %p334 = scmp.lt.s32.totalorder %s26, 1
      %s335 = scalar_select %p334, %s26, 1
      %p336 = scmp.lt.s32.totalorder %s333, 1
      %s337 = scalar_select %p336, %s333, 1
      %s338 = smul.addr %s335, 2
      %s339 = sadd.s32 %s337, %s338
      %s340 = smul.addr %s339, 4
      %s341 = scalar_lea.vmem %s0, %s340
      %p342 = pneg %p57
      %p343 = pneg %p54
      %s344 = smul.u32 2, %s27
      %p345 = scmp.lt.s32.totalorder %s26, 1
      %s346 = scalar_select %p345, %s26, 1
      %p347 = scmp.lt.s32.totalorder %s344, 1
      %s348 = scalar_select %p347, %s344, 1
      %s349 = smul.addr %s346, 2
      %s350 = sadd.s32 %s348, %s349
      %s351 = smul.addr %s350, 8
      %s352 = scalar_lea.vmem %s1, %s351
      %p353 = pneg %p85
      %p354 = pneg %p82
      %p355 = pneg %p106
      %p356 = pneg %p103
      %p357 = pneg %p127
      %p358 = pneg %p124
      %p359 = pneg %p148
      %p360 = pneg %p145
      %p361 = pneg %p169
      %p362 = pneg %p166
      %p363 = pneg %p190
      %p364 = pneg %p187
      %p365 = pneg %p211
      %p366 = pneg %p208
      %p367 = pneg %p232
      %p368 = pneg %p229
      %p369 = pneg %p260
      %p370 = pneg %p257
      %s371 = smul.u32 2, %s27
      %p372 = scmp.lt.s32.totalorder %s26, 1
      %s373 = scalar_select %p372, %s26, 1
      %p374 = scmp.lt.s32.totalorder %s371, 1
      %s375 = scalar_select %p374, %s371, 1
      %s376 = smul.addr %s373, 2
      %s377 = sadd.s32 %s375, %s376
      %s378 = smul.addr %s377, 8
      %s379 = scalar_lea.vmem %s9, %s378
      %s380 = smul.u32 2, %s27
      %p381 = scmp.lt.s32.totalorder %s26, 1
      %s382 = scalar_select %p381, %s26, 1
      %p383 = scmp.lt.s32.totalorder %s380, 1
      %s384 = scalar_select %p383, %s380, 1
      %s385 = smul.addr %s382, 2
      %s386 = sadd.s32 %s384, %s385
      %s387 = smul.addr %s386, 4
      %s388 = scalar_lea.vmem %s0, %s387
      %s389 = smul.u32 2, %s27
      %s390 = smul.u32 2, %s27
      %p391 = scmp.lt.s32.totalorder %s26, 1
      %s392 = scalar_select %p391, %s26, 1
      %p393 = scmp.lt.s32.totalorder %s390, 1
      %s394 = scalar_select %p393, %s390, 1
      %s395 = smul.addr %s392, 2
      %s396 = sadd.s32 %s394, %s395
      %s397 = smul.addr %s396, 8
      %s398 = scalar_lea.vmem %s1, %s397
      %s399 = smul.u32 2, %s27
      %s400 = smul.u32 2, %s27
      %p401 = scmp.lt.s32.totalorder %s26, 1
      %s402 = scalar_select %p401, %s26, 1
      %p403 = scmp.lt.s32.totalorder %s400, 1
      %s404 = scalar_select %p403, %s400, 1
      %s405 = smul.addr %s402, 2
      %s406 = sadd.s32 %s404, %s405
      %s407 = smul.addr %s406, 8
      %s408 = scalar_lea.vmem %s9, %s407
      %s409 = smul.u32 2, %s27
      %v410 = vld [vmem:[%s388] sm:$0xff]
      %v411 = vld [vmem:[%s3] sm:$0xff]
      %v412 = vld [vmem:[%s398] sm:$0x3f]
      %v413 = vld [vmem:[%s398 + $0x8] sm:$0x3f]
      %vm414 = vcmask 48128
      %v416 = vsel %vm414, %v411, 0
      %vm418 = vcmask 1045504
      %v420 = vsel %vm418, %v412, 0
      %v423 = vsel %vm418, %v413, 0
      %425 = vmatpush.msra.mxu0 0.0
      %426 = vmatpush.msra.mxu0 0.0
      %427 = vmatpush.msra.mxu0 0.0
      %428 = vmatpush.msra.mxu0 0.0
      %429 = vmatpush.msra.mxu0 0.0
      %430 = vmatpush.msra.mxu0 0.0
      %431 = vmatpush.msra.mxu0 0.0
      %432 = vmatpush.msra.mxu0 0.0
      %433 = vmatpush.msra.mxu0 0.0
      %434 = vmatpush.msra.mxu0 0.0
      %435 = vmatpush.msra.mxu0 0.0
      %436 = vmatpush.msra.mxu0 0.0
      %437 = vmatpush.msra.mxu0 0.0
      %438 = vmatpush.msra.mxu0 0.0
      %439 = vmatpush.msra.mxu0 0.0
      %440 = vmatpush.msra.mxu0 %v420
      %441 = vmatmul.f32.gmra.mxu0 %v416
      %v442 = vpop.f32.mrf.mxu0
      %v443 = vadd.f32 0.0, %v442
      %444 = vdwg.mxu0
      %445 = vmatpush.msra.mxu0 0.0
      %446 = vmatpush.msra.mxu0 0.0
      %447 = vmatpush.msra.mxu0 0.0
      %448 = vmatpush.msra.mxu0 0.0
      %449 = vmatpush.msra.mxu0 0.0
      %450 = vmatpush.msra.mxu0 0.0
      %451 = vmatpush.msra.mxu0 0.0
      %452 = vmatpush.msra.mxu0 0.0
      %453 = vmatpush.msra.mxu0 0.0
      %454 = vmatpush.msra.mxu0 0.0
      %455 = vmatpush.msra.mxu0 0.0
      %456 = vmatpush.msra.mxu0 0.0
      %457 = vmatpush.msra.mxu0 0.0
      %458 = vmatpush.msra.mxu0 0.0
      %459 = vmatpush.msra.mxu0 0.0
      %460 = vmatpush.msra.mxu0 %v423
      %461 = vmatmul.f32.gmra.mxu0 %v416
      %v462 = vpop.f32.mrf.mxu0
      %v463 = vadd.f32 0.0, %v462
      %464 = vdwg.mxu0
      %v465 = vld [vmem:[%s2] sm:$0xff]
      %v466 = vld [vmem:[%s4] sm:$0xff]
      %v467 = vld [vmem:[%s5] sm:$0xff]
      %v468 = vld [vmem:[#allocation2] sm:$0x1]
      %v469 = vld [vmem:[%s7] sm:$0x3f]
      %v470 = vld [vmem:[%s8] sm:$0x3f]
      %472 = vst [vmem:[#allocation1] ss:$2 sm:$0xff] %v410
      %v473 = vld.sshfl [vmem:[#allocation1] sm:$0xff pattern:$0x75316420]
      %v474 = vld.sshfl [vmem:[#allocation1 + $0x8] sm:$0xff pattern:$0x75316420]
      %vm475 = vcmask 31744
      %v477 = vsel %vm475, %v465, 0
      %vm479 = vcmask 1043456
      %v480 = vsel %vm479, %v473, 0
      %v482 = vsel %vm479, %v474, 0
      %484 = vmatpush.msra.mxu0 0.0
      %485 = vmatpush.msra.mxu0 0.0
      %486 = vmatpush.msra.mxu0 0.0
      %487 = vmatpush.msra.mxu0 0.0
      %488 = vmatpush.msra.mxu0 0.0
      %489 = vmatpush.msra.mxu0 0.0
      %490 = vmatpush.msra.mxu0 0.0
      %491 = vmatpush.msra.mxu0 0.0
      %492 = vmatpush.msra.mxu0 0.0
      %493 = vmatpush.msra.mxu0 0.0
      %494 = vmatpush.msra.mxu0 0.0
      %495 = vmatpush.msra.mxu0 0.0
      %496 = vmatpush.msra.mxu0 0.0
      %497 = vmatpush.msra.mxu0 0.0
      %498 = vmatpush.msra.mxu0 0.0
      %499 = vmatpush.msra.mxu0 %v480
      %500 = vmatmul.f32.gmra.mxu0 %v477
      %v501 = vpop.f32.mrf.mxu0
      %v502 = vadd.f32 %v443, %v501
      %503 = vdwg.mxu0
      %504 = vmatpush.msra.mxu0 0.0
      %505 = vmatpush.msra.mxu0 0.0
      %506 = vmatpush.msra.mxu0 0.0
      %507 = vmatpush.msra.mxu0 0.0
      %508 = vmatpush.msra.mxu0 0.0
      %509 = vmatpush.msra.mxu0 0.0
      %510 = vmatpush.msra.mxu0 0.0
      %511 = vmatpush.msra.mxu0 0.0
      %512 = vmatpush.msra.mxu0 0.0
      %513 = vmatpush.msra.mxu0 0.0
      %514 = vmatpush.msra.mxu0 0.0
      %515 = vmatpush.msra.mxu0 0.0
      %516 = vmatpush.msra.mxu0 0.0
      %517 = vmatpush.msra.mxu0 0.0
      %518 = vmatpush.msra.mxu0 0.0
      %519 = vmatpush.msra.mxu0 %v482
      %520 = vmatmul.f32.gmra.mxu0 %v477
      %v521 = vpop.f32.mrf.mxu0
      %v522 = vadd.f32 %v463, %v521
      %523 = vdwg.mxu0
      %525 = vset.pattern.permute.xlu0 0
      %526 = vperm.xlu0 %525, %v466
      %v527 = vpop.permute.xlu0 %526
      %v529 = vadd.f32 %v502, %v527
      %v530 = vadd.f32 %v522, %v527
      %v531 = vmax.f32 %v529, 0.0
      %v532 = vmax.f32 %v530, 0.0
      %534 = vset.pattern.permute.xlu0 0
      %535 = vperm.xlu0 %534, %v467
      %v536 = vpop.permute.xlu0 %535
      %v538 = vmul.f32 %v531, %v536
      %v539 = vmul.f32 %v532, %v536
      %v540 = vrot.slane %v538, 4
      %v541 = vadd.f32 %v538, %v540
      %v542 = vrot.slane %v541, 2
      %v543 = vadd.f32 %v541, %v542
      %v544 = vrot.slane %v543, 1
      %v545 = vadd.f32 %v543, %v544
      %v546 = vrot.slane %v539, 4
      %v547 = vadd.f32 %v539, %v546
      %v548 = vrot.slane %v547, 2
      %v549 = vadd.f32 %v547, %v548
      %v550 = vrot.slane %v549, 1
      %v551 = vadd.f32 %v549, %v550
      %553 = vset.pattern.permute.xlu0 0
      %554 = vperm.xlu0 %553, %v468
      %v555 = vpop.permute.xlu0 %554
      %v557 = vperm.slane %v555, 0
      %v558 = vadd.f32 %v545, %v557
      %v559 = vadd.f32 %v551, %v557
      %v560 = vxor.u32 %v558, 2147483648
      %v561 = vxor.u32 %v559, 2147483648
      %v562 = vmul.f32 %v560, 1.442695
      %v563 = vpow.pop %v562
      %v564 = vmul.f32 %v561, 1.442695
      %v565 = vpow.pop %v564
      %v566 = vadd.f32 %v563, 1.0
      %v567 = vadd.f32 %v565, 1.0
      %v568 = vrcp.pop %v566
      %v569 = vmul.f32 %v566, %v568
      %v570 = vsub.f32 1.0, %v569
      %v571 = vmul.f32 %v568, %v570
      %v572 = vadd.f32 %v568, %v571
      %vm573 = vweird.f32 %v566
      %vm574 = vweird.f32 %v568
      %vm575 = vmor %vm573, %vm574
      %v576 = vsel %vm575, %v568, %v572
      %v577 = vand.u32 2147483647, %v566
      %vm578 = vcmp.eq.f32.partialorder %v577, 8.507059e+37
      %v579 = vand.u32 %v566, 2147483648
      %v580 = vor.u32 1.1754944e-38, %v579
      %v581 = vsel %vm578, %v580, %v576
      %v582 = vmul.f32 1.0, %v581
      %v583 = vrcp.pop %v567
      %v584 = vmul.f32 %v567, %v583
      %v585 = vsub.f32 1.0, %v584
      %v586 = vmul.f32 %v583, %v585
      %v587 = vadd.f32 %v583, %v586
      %vm588 = vweird.f32 %v567
      %vm589 = vweird.f32 %v583
      %vm590 = vmor %vm588, %vm589
      %v591 = vsel %vm590, %v583, %v587
      %v592 = vand.u32 2147483647, %v567
      %vm593 = vcmp.eq.f32.partialorder %v592, 8.507059e+37
      %v594 = vand.u32 %v567, 2147483648
      %v595 = vor.u32 1.1754944e-38, %v594
      %v596 = vsel %vm593, %v595, %v591
      %v597 = vmul.f32 1.0, %v596
      %v600 = vrot.slane %v597, 4
      %v601 = vsel %vm479, %v582, %v600
      %v603 = vmul.f32 %v410, %v601
      %605 = vset.pattern.permute.xlu0 0
      %606 = vperm.xlu0 %605, %v470
      %v607 = vpop.permute.xlu0 %606
      %610 = vst [vmem:[#allocation1] ss:$2 sm:$0xff] %v603
      %v611 = vld.sshfl [vmem:[#allocation1] sm:$0xff pattern:$0x75316420]
      %v612 = vld.sshfl [vmem:[#allocation1 + $0x8] sm:$0xff pattern:$0x75316420]
      %v614 = vsel %vm475, %v469, 0
      %v616 = vsel %vm479, %v611, 0
      %v618 = vsel %vm479, %v612, 0
      %620 = vmatpush.msra.mxu0 0.0
      %621 = vmatpush.msra.mxu0 0.0
      %622 = vmatpush.msra.mxu0 0.0
      %623 = vmatpush.msra.mxu0 0.0
      %624 = vmatpush.msra.mxu0 0.0
      %625 = vmatpush.msra.mxu0 0.0
      %626 = vmatpush.msra.mxu0 0.0
      %627 = vmatpush.msra.mxu0 0.0
      %628 = vmatpush.msra.mxu0 0.0
      %629 = vmatpush.msra.mxu0 0.0
      %630 = vmatpush.msra.mxu0 0.0
      %631 = vmatpush.msra.mxu0 0.0
      %632 = vmatpush.msra.mxu0 0.0
      %633 = vmatpush.msra.mxu0 0.0
      %634 = vmatpush.msra.mxu0 0.0
      %635 = vmatpush.msra.mxu0 %v616
      %636 = vmatmul.f32.gmra.mxu0 %v614
      %v637 = vpop.f32.mrf.mxu0
      %v638 = vadd.f32 %v607, %v637
      %639 = vdwg.mxu0
      %640 = vmatpush.msra.mxu0 0.0
      %641 = vmatpush.msra.mxu0 0.0
      %642 = vmatpush.msra.mxu0 0.0
      %643 = vmatpush.msra.mxu0 0.0
      %644 = vmatpush.msra.mxu0 0.0
      %645 = vmatpush.msra.mxu0 0.0
      %646 = vmatpush.msra.mxu0 0.0
      %647 = vmatpush.msra.mxu0 0.0
      %648 = vmatpush.msra.mxu0 0.0
      %649 = vmatpush.msra.mxu0 0.0
      %650 = vmatpush.msra.mxu0 0.0
      %651 = vmatpush.msra.mxu0 0.0
      %652 = vmatpush.msra.mxu0 0.0
      %653 = vmatpush.msra.mxu0 0.0
      %654 = vmatpush.msra.mxu0 0.0
      %655 = vmatpush.msra.mxu0 %v618
      %656 = vmatmul.f32.gmra.mxu0 %v614
      %v657 = vpop.f32.mrf.mxu0
      %v658 = vadd.f32 %v607, %v657
      %659 = vdwg.mxu0
      %660 = vst [vmem:[%s408] sm:$0x3f] %v638
      %661 = vst [vmem:[%s408 + $0x8] sm:$0x3f] %v658
      %s662 = smul.u32 2, %s27
      %p663 = scmp.lt.s32.totalorder %s26, 1
      %s664 = scalar_select %p663, %s26, 1
      %p665 = scmp.lt.s32.totalorder %s662, 1
      %s666 = scalar_select %p665, %s662, 1
      %s667 = smul.addr %s664, 2
      %s668 = sadd.s32 %s666, %s667
      %s669 = smul.addr %s668, 8
      %s670 = scalar_lea.vmem %s9, %s669
      // Predicated region
      $region57: #{tpu_custom_call.1} parent=55 // pred_check
        %p671 = pneg %p257
      $region58: #{tpu_custom_call.1} parent=55 // pred_check_branch
        %673 = sbr.rel (%p671) target = $region60
      $region59: #{tpu_custom_call.1} parent=55 // pred_region
        %s674 = smul.u32 2, %s27
      $region60: #{tpu_custom_call.1} parent=55 // pred_fallthru
        _
    $region56: #{tpu_custom_call.1} parent=5 // pred_fallthru
      _
    %p675 = scmp.le.s32.totalorder 2, %s17
    // Predicated region
    $region61: #{tpu_custom_call.1} parent=5 // pred_check
      %p676 = pneg %p675
    $region62: #{tpu_custom_call.1} parent=5 // pred_check_branch
      %678 = sbr.rel (%p676) target = $region64
    $region63: #{tpu_custom_call.1} parent=5 // pred_region
      %s679 = ssub.s32 %s17, 2
      // Predicated region
      $region65: #{tpu_custom_call.1} parent=63 // pred_check
        %p680 = pneg %p263
      $region66: #{tpu_custom_call.1} parent=63 // pred_check_branch
        %682 = sbr.rel (%p680) target = $region68
      $region67: #{tpu_custom_call.1} parent=63 // pred_region
        %s683 = smul.u32 2, %s29
        %p684 = scmp.lt.s32.totalorder %s28, 1
        %s685 = scalar_select %p684, %s28, 1
        %p686 = scmp.lt.s32.totalorder %s683, 1
        %s687 = scalar_select %p686, %s683, 1
        %s688 = smul.addr %s685, 2
        %s689 = sadd.s32 %s687, %s688
        %s690 = smul.addr %s689, 8
        %s691 = scalar_lea.vmem %s9, %s690
      $region68: #{tpu_custom_call.1} parent=63 // pred_fallthru
        _
    $region64: #{tpu_custom_call.1} parent=5 // pred_fallthru
      _
  $region6: #{tpu_custom_call.1} parent=0 // loop_footer
    %s21 = sadd.s32 1, %s17
  $region7: #{tpu_custom_call.1} parent=0 // loop_footer_branch
    %16 = sbr.rel target = $region3
  $region8: #{tpu_custom_call.1} parent=0 // loop_exit
    _

</llo_original>
